<compile_context>
chip_gen: v6e
topology: v6e:2x2x1
jax: 0.10.0
libtpu: 0.0.40
codegen_flags: <defaults>
</compile_context>

<pallas_src>
import numpy as np
import jax
import jax.numpy as jnp
from jax.experimental import pallas as pl
from jax.experimental.pallas import tpu as pltpu

# ----------------------------- problem shapes --------------------------------
B = 256                                 # batch
D_IN, H_ENC, N_LATENT, H_FLOW = 64, 32, 8, 32
LOG_2PI = float(np.log(2.0 * np.pi))

# ------------------------ parameter-slab row layout ---------------------------
def _align8(n):
    return ((n + 7) // 8) * 8

R_WE1 = 0                               # (D_IN, H_ENC)
R_BE1 = R_WE1 + _align8(D_IN)           # (1, H_ENC)
R_WCE = R_BE1 + 8                       # (H_ENC, N_LATENT + H_FLOW)  enc2 | enc2@w1a
R_BCE = R_WCE + _align8(H_ENC)          # (1, N_LATENT + H_FLOW)
R_WCA = R_BCE + 8                       # (H_FLOW, 2*N_LATENT + 1)    mu|alpha|-sum(alpha)
R_BCA = R_WCA + _align8(H_FLOW)         # (1, 2*N_LATENT + 1)
R_W1B = R_BCA + 8                       # (N_LATENT, H_FLOW)          perm folded in
R_B1B = R_W1B + _align8(N_LATENT)       # (1, H_FLOW)
R_WCB = R_B1B + 8                       # (H_FLOW, 2*N_LATENT + 1)    perm folded in
R_BCB = R_WCB + _align8(H_FLOW)         # (1, 2*N_LATENT + 1)
SLAB_ROWS = R_BCB + 8                   # = 208
SLAB_COLS = 128


# ----------------------------- Pallas kernel ---------------------------------
def outlier_kernel(x_ref, slab_ref, lp_ref):
    x = x_ref[...]                                                    # (TB, D_IN)

    # -- recover parameter views from the packed slab (static slices) --
    we1 = slab_ref[R_WE1:R_WE1 + D_IN, :H_ENC]
    be1 = slab_ref[R_BE1:R_BE1 + 1, :H_ENC]
    wce = slab_ref[R_WCE:R_WCE + H_ENC, :N_LATENT + H_FLOW]
    bce = slab_ref[R_BCE:R_BCE + 1, :N_LATENT + H_FLOW]
    wca = slab_ref[R_WCA:R_WCA + H_FLOW, :2 * N_LATENT + 1]
    bca = slab_ref[R_BCA:R_BCA + 1, :2 * N_LATENT + 1]
    w1b = slab_ref[R_W1B:R_W1B + N_LATENT, :H_FLOW]
    b1b = slab_ref[R_B1B:R_B1B + 1, :H_FLOW]
    wcb = slab_ref[R_WCB:R_WCB + H_FLOW, :2 * N_LATENT + 1]
    bcb = slab_ref[R_BCB:R_BCB + 1, :2 * N_LATENT + 1]

    # -- encoder layer 1 --
    h = jnp.tanh(jnp.dot(x, we1, preferred_element_type=jnp.float32) + be1)

    # -- fused: encoder layer 2  +  MADE-A first-layer pre-activation --
    sa = jnp.dot(h, wce, preferred_element_type=jnp.float32) + bce    # (TB, L+H)
    s = sa[:, :N_LATENT]                                              # latent
    h1a = jnp.maximum(sa[:, N_LATENT:], 0.0)                          # relu(s@w1a+b1a)

    # -- MADE-A head: [mu | alpha | -sum(alpha)] in one matmul --
    ma = jnp.dot(h1a, wca, preferred_element_type=jnp.float32) + bca  # (TB, 2L+1)
    mu_a = ma[:, :N_LATENT]
    al_a = ma[:, N_LATENT:2 * N_LATENT]
    ld0 = ma[:, 2 * N_LATENT:2 * N_LATENT + 1]                        # (TB, 1)
    u0 = (s - mu_a) * jnp.exp(-al_a)

    # -- MADE-B (reverse permutation already folded into weights) --
    h1b = jnp.maximum(
        jnp.dot(u0, w1b, preferred_element_type=jnp.float32) + b1b, 0.0)
    mb = jnp.dot(h1b, wcb, preferred_element_type=jnp.float32) + bcb  # (TB, 2L+1)
    mu_b = mb[:, :N_LATENT]
    al_b = mb[:, N_LATENT:2 * N_LATENT]
    ld1 = mb[:, 2 * N_LATENT:2 * N_LATENT + 1]                        # (TB, 1)
    u1 = (u0 - mu_b) * jnp.exp(-al_b)

    # -- standard-normal base density + log-dets --
    base = (-0.5 * jnp.sum(u1 * u1, axis=-1, keepdims=True)
            - 0.5 * N_LATENT * LOG_2PI)                               # (TB, 1)
    lp_ref[...] = base + ld0 + ld1


# ------------------------------- wrapper --------------------------------------
def _pick_batch_tile(n_rows):
    """One tile on single-core v5e/v6e; >=2 grid steps on dual-core v7x."""
    try:
        kind = jax.devices()[0].device_kind.lower()
    except Exception:
        kind = ""
    n_cores = 2 if "v7" in kind else 1
    tb = n_rows // n_cores
    if n_cores > 1 and (n_rows % n_cores != 0 or tb % 8 != 0):
        tb = n_rows                      # fallback: single tile
    return tb


@jax.jit
def outlier_log_prob(x, slab):
    n_rows = x.shape[0]
    tb = _pick_batch_tile(n_rows)
    nb = n_rows // tb
    lp = pl.pallas_call(
        outlier_kernel,
        out_shape=jax.ShapeDtypeStruct((n_rows, 1), jnp.float32),
        grid_spec=pltpu.PrefetchScalarGridSpec(
            num_scalar_prefetch=0,
            grid=(nb,),
            in_specs=[
                pl.BlockSpec((tb, D_IN), lambda i: (i, 0)),               # x tile
                pl.BlockSpec((SLAB_ROWS, SLAB_COLS), lambda i: (0, 0)),    # weights resident
            ],
            out_specs=pl.BlockSpec((tb, 1), lambda i: (i, 0)),
        ),
        compiler_params=pltpu.CompilerParams(
            dimension_semantics=("parallel",)),
    )(x, slab)
    return lp.reshape(-1)


# -------------------------- parameter construction ----------------------------
def made_masks(n_latent, n_hidden):
    """Standard MADE degree masks (strict autoregressive output)."""
    d_in = np.arange(1, n_latent + 1)                          # (L,)
    d_h = (np.arange(n_hidden) % (n_latent - 1)) + 1           # (H,) in 1..L-1
    m_in = (d_h[None, :] >= d_in[:, None]).astype(np.float32)  # (L, H)
    m_out = (d_in[None, :] > d_h[:, None]).astype(np.float32)  # (H, L)
    return jnp.asarray(m_in), jnp.asarray(m_out)


def init_params(key):
    ks = jax.random.split(key, 20)
    f32 = jnp.float32

    def w(k, shape, fan_in):
        return (0.5 / np.sqrt(fan_in)) * jax.random.normal(k, shape, f32)

    # encoder
    we1 = w(ks[0], (D_IN, H_ENC), D_IN)
    be1 = 0.01 * jax.random.normal(ks[1], (1, H_ENC), f32)
    we2 = w(ks[2], (H_ENC, N_LATENT), H_ENC)
    be2 = 0.01 * jax.random.normal(ks[3], (1, N_LATENT), f32)

    # reverse permutation between MAF layers (as a matrix, for the reference)
    perm = jnp.asarray(np.eye(N_LATENT, dtype=np.float32)[::-1].copy())

    m_in, m_out = made_masks(N_LATENT, H_FLOW)

    def made_params(k0, k1, k2, k3, k4, k5):
        w1 = w(k0, (N_LATENT, H_FLOW), N_LATENT) * m_in
        b1 = 0.01 * jax.random.normal(k1, (1, H_FLOW), f32)
        wm = w(k2, (H_FLOW, N_LATENT), H_FLOW) * m_out
        bm = 0.01 * jax.random.normal(k3, (1, N_LATENT), f32)
        wa = 0.1 * w(k4, (H_FLOW, N_LATENT), H_FLOW) * m_out
        ba = 0.01 * jax.random.normal(k5, (1, N_LATENT), f32)
        return w1, b1, wm, bm, wa, ba

    made_a = made_params(*ks[4:10])
    made_b = made_params(*ks[10:16])

    return (we1, be1, we2, be2, perm) + made_a + made_b


def pack_params(params):
    """Fold perm + enc2@w1a, fuse mu/alpha/logdet heads, pack into one f32 slab."""
    (we1, be1, we2, be2, perm,
     w1a, b1a, wma, bma, waa, baa,
     w1b, b1b, wmb, bmb, wab, bab) = [np.asarray(p, np.float32) for p in params]

    # Fold the reverse permutation into MADE-B (exact: P orthogonal, P @ P = I).
    w1b_f = perm @ w1b
    wmb_f = wmb @ perm
    bmb_f = bmb @ perm
    wab_f = wab @ perm
    bab_f = bab @ perm

    # Fuse encoder layer-2 with MADE-A first-layer pre-activation (exact fold).
    wce = np.concatenate([we2, we2 @ w1a], axis=1)                 # (H_ENC, L+H)
    bce = np.concatenate([be2, be2 @ w1a + b1a], axis=1)           # (1, L+H)

    # Fused heads with log-det column: [mu | alpha | -sum(alpha)].
    wca = np.concatenate([wma, waa, -waa.sum(axis=1, keepdims=True)], axis=1)
    bca = np.concatenate([bma, baa, -baa.sum(axis=1, keepdims=True)], axis=1)
    wcb = np.concatenate([wmb_f, wab_f, -wab_f.sum(axis=1, keepdims=True)], axis=1)
    bcb = np.concatenate([bmb_f, bab_f, -bab_f.sum(axis=1, keepdims=True)], axis=1)

    slab = np.zeros((SLAB_ROWS, SLAB_COLS), np.float32)

    def put(row, a):
        slab[row:row + a.shape[0], :a.shape[1]] = a

    put(R_WE1, we1); put(R_BE1, be1)
    put(R_WCE, wce); put(R_BCE, bce)
    put(R_WCA, wca); put(R_BCA, bca)
    put(R_W1B, w1b_f); put(R_B1B, b1b)
    put(R_WCB, wcb); put(R_BCB, bcb)
    return jnp.asarray(slab)


# ------------------------------ JAX reference ---------------------------------
def reference_log_prob(x, params):
    (we1, be1, we2, be2, perm,
     w1a, b1a, wma, bma, waa, baa,
     w1b, b1b, wmb, bmb, wab, bab) = params
    s = jnp.tanh(x @ we1 + be1) @ we2 + be2

    def made(u, w1, b1, wm, bm, wa, ba):
        hh = jnp.maximum(u @ w1 + b1, 0.0)
        mu, alpha = hh @ wm + bm, hh @ wa + ba
        return (u - mu) * jnp.exp(-alpha), -jnp.sum(alpha, axis=-1)

    u0, ld0 = made(s, w1a, b1a, wma, bma, waa, baa)
    u1, ld1 = made(u0 @ perm, w1b, b1b, wmb, bmb, wab, bab)
    base = -0.5 * jnp.sum(u1 * u1, axis=-1) - 0.5 * N_LATENT * LOG_2PI
    return base + ld0 + ld1


# --------------------------------- main ----------------------------------------
if __name__ == "__main__":
    key = jax.random.PRNGKey(0)
    kx, kp = jax.random.split(key)
    x = jax.random.normal(kx, (B, D_IN), jnp.float32)
    params = init_params(kp)
    slab = pack_params(params)

    lp = outlier_log_prob(x, slab)
    jax.block_until_ready(lp)

    lp_ref = reference_log_prob(x, params)
    assert lp.shape == (B,)
    np.testing.assert_allclose(np.asarray(lp), np.asarray(lp_ref),
                               rtol=1e-4, atol=1e-4)
    print("KERNEL_OK")
</pallas_src>

<mosaic_0001>
module attributes {stable_mosaic.version = 11 : i64} {
  func.func @outlier_kernel(%arg0: i32, %arg1: memref<256x64xf32, #tpu.memory_space<vmem>>, %arg2: memref<208x128xf32, #tpu.memory_space<vmem>>, %arg3: memref<256x1xf32, #tpu.memory_space<vmem>>) attributes {dimension_semantics = [#tpu.dimension_semantics<parallel>], iteration_bounds = array<i64: 1>, scalar_prefetch = 0 : i64, scratch_operands = 0 : i64, tpu.core_type = #tpu.core_type<tc>, window_params = [{transform_indices = @transform_0, window_bounds = array<i64: 256, 64>}, {pipeline_mode = #tpu.pipeline_mode<synchronous>, transform_indices = @transform_1, window_bounds = array<i64: 208, 128>}, {transform_indices = @transform_2, window_bounds = array<i64: 256, 1>}]} {
    %c0 = arith.constant 0 : index
    %c0_0 = arith.constant 0 : index
    %0 = vector.load %arg1[%c0, %c0_0] : memref<256x64xf32, #tpu.memory_space<vmem>>, vector<256x64xf32>
    %c0_1 = arith.constant 0 : index
    %c0_2 = arith.constant 0 : index
    %1 = vector.load %arg2[%c0_1, %c0_2] : memref<208x128xf32, #tpu.memory_space<vmem>>, vector<64x32xf32>
    %c64 = arith.constant 64 : index
    %c0_3 = arith.constant 0 : index
    %2 = vector.load %arg2[%c64, %c0_3] : memref<208x128xf32, #tpu.memory_space<vmem>>, vector<1x32xf32>
    %c72 = arith.constant 72 : index
    %c0_4 = arith.constant 0 : index
    %3 = vector.load %arg2[%c72, %c0_4] : memref<208x128xf32, #tpu.memory_space<vmem>>, vector<32x40xf32>
    %c104 = arith.constant 104 : index
    %c0_5 = arith.constant 0 : index
    %4 = vector.load %arg2[%c104, %c0_5] : memref<208x128xf32, #tpu.memory_space<vmem>>, vector<1x40xf32>
    %c112 = arith.constant 112 : index
    %c0_6 = arith.constant 0 : index
    %5 = vector.load %arg2[%c112, %c0_6] : memref<208x128xf32, #tpu.memory_space<vmem>>, vector<32x17xf32>
    %c144 = arith.constant 144 : index
    %c0_7 = arith.constant 0 : index
    %6 = vector.load %arg2[%c144, %c0_7] : memref<208x128xf32, #tpu.memory_space<vmem>>, vector<1x17xf32>
    %c152 = arith.constant 152 : index
    %c0_8 = arith.constant 0 : index
    %7 = vector.load %arg2[%c152, %c0_8] : memref<208x128xf32, #tpu.memory_space<vmem>>, vector<8x32xf32>
    %c160 = arith.constant 160 : index
    %c0_9 = arith.constant 0 : index
    %8 = vector.load %arg2[%c160, %c0_9] : memref<208x128xf32, #tpu.memory_space<vmem>>, vector<1x32xf32>
    %c168 = arith.constant 168 : index
    %c0_10 = arith.constant 0 : index
    %9 = vector.load %arg2[%c168, %c0_10] : memref<208x128xf32, #tpu.memory_space<vmem>>, vector<32x17xf32>
    %c200 = arith.constant 200 : index
    %c0_11 = arith.constant 0 : index
    %10 = vector.load %arg2[%c200, %c0_11] : memref<208x128xf32, #tpu.memory_space<vmem>>, vector<1x17xf32>
    %cst = arith.constant dense<0.000000e+00> : vector<256x32xf32>
    %11 = tpu.matmul %0, %1, %cst {dimension_numbers = #tpu.dot_dimension_numbers<[1], [0], [0], [1], [0, 0, 1, 1], [], []>} : vector<256x64xf32>, vector<64x32xf32>, vector<256x32xf32> -> vector<256x32xf32>
    %12 = vector.broadcast %2 : vector<1x32xf32> to vector<256x32xf32>
    %13 = arith.addf %11, %12 : vector<256x32xf32>
    %14 = math.tanh %13 : vector<256x32xf32>
    %cst_12 = arith.constant dense<0.000000e+00> : vector<256x40xf32>
    %15 = tpu.matmul %14, %3, %cst_12 {dimension_numbers = #tpu.dot_dimension_numbers<[1], [0], [0], [1], [0, 0, 1, 1], [], []>} : vector<256x32xf32>, vector<32x40xf32>, vector<256x40xf32> -> vector<256x40xf32>
    %16 = vector.broadcast %4 : vector<1x40xf32> to vector<256x40xf32>
    %17 = arith.addf %15, %16 : vector<256x40xf32>
    %18 = vector.extract_strided_slice %17 {offsets = [0, 0], sizes = [256, 8], strides = [1, 1]} : vector<256x40xf32> to vector<256x8xf32>
    %19 = vector.extract_strided_slice %17 {offsets = [0, 8], sizes = [256, 32], strides = [1, 1]} : vector<256x40xf32> to vector<256x32xf32>
    %cst_13 = arith.constant 0.000000e+00 : f32
    %20 = vector.broadcast %cst_13 : f32 to vector<256x32xf32>
    %21 = arith.maximumf %19, %20 : vector<256x32xf32>
    %cst_14 = arith.constant dense<0.000000e+00> : vector<256x17xf32>
    %22 = tpu.matmul %21, %5, %cst_14 {dimension_numbers = #tpu.dot_dimension_numbers<[1], [0], [0], [1], [0, 0, 1, 1], [], []>} : vector<256x32xf32>, vector<32x17xf32>, vector<256x17xf32> -> vector<256x17xf32>
    %23 = vector.broadcast %6 : vector<1x17xf32> to vector<256x17xf32>
    %24 = arith.addf %22, %23 : vector<256x17xf32>
    %25 = vector.extract_strided_slice %24 {offsets = [0, 0], sizes = [256, 8], strides = [1, 1]} : vector<256x17xf32> to vector<256x8xf32>
    %26 = vector.extract_strided_slice %24 {offsets = [0, 8], sizes = [256, 8], strides = [1, 1]} : vector<256x17xf32> to vector<256x8xf32>
    %27 = vector.extract_strided_slice %24 {offsets = [0, 16], sizes = [256, 1], strides = [1, 1]} : vector<256x17xf32> to vector<256x1xf32>
    %28 = arith.subf %18, %25 : vector<256x8xf32>
    %cst_15 = arith.constant 0.000000e+00 : f32
    %29 = vector.broadcast %cst_15 : f32 to vector<256x8xf32>
    %30 = arith.subf %29, %26 : vector<256x8xf32>
    %31 = math.exp %30 : vector<256x8xf32>
    %32 = arith.mulf %28, %31 : vector<256x8xf32>
    %cst_16 = arith.constant dense<0.000000e+00> : vector<256x32xf32>
    %33 = tpu.matmul %32, %7, %cst_16 {dimension_numbers = #tpu.dot_dimension_numbers<[1], [0], [0], [1], [0, 0, 1, 1], [], []>} : vector<256x8xf32>, vector<8x32xf32>, vector<256x32xf32> -> vector<256x32xf32>
    %34 = vector.broadcast %8 : vector<1x32xf32> to vector<256x32xf32>
    %35 = arith.addf %33, %34 : vector<256x32xf32>
    %cst_17 = arith.constant 0.000000e+00 : f32
    %36 = vector.broadcast %cst_17 : f32 to vector<256x32xf32>
    %37 = arith.maximumf %35, %36 : vector<256x32xf32>
    %cst_18 = arith.constant dense<0.000000e+00> : vector<256x17xf32>
    %38 = tpu.matmul %37, %9, %cst_18 {dimension_numbers = #tpu.dot_dimension_numbers<[1], [0], [0], [1], [0, 0, 1, 1], [], []>} : vector<256x32xf32>, vector<32x17xf32>, vector<256x17xf32> -> vector<256x17xf32>
    %39 = vector.broadcast %10 : vector<1x17xf32> to vector<256x17xf32>
    %40 = arith.addf %38, %39 : vector<256x17xf32>
    %41 = vector.extract_strided_slice %40 {offsets = [0, 0], sizes = [256, 8], strides = [1, 1]} : vector<256x17xf32> to vector<256x8xf32>
    %42 = vector.extract_strided_slice %40 {offsets = [0, 8], sizes = [256, 8], strides = [1, 1]} : vector<256x17xf32> to vector<256x8xf32>
    %43 = vector.extract_strided_slice %40 {offsets = [0, 16], sizes = [256, 1], strides = [1, 1]} : vector<256x17xf32> to vector<256x1xf32>
    %44 = arith.subf %32, %41 : vector<256x8xf32>
    %cst_19 = arith.constant 0.000000e+00 : f32
    %45 = vector.broadcast %cst_19 : f32 to vector<256x8xf32>
    %46 = arith.subf %45, %42 : vector<256x8xf32>
    %47 = math.exp %46 : vector<256x8xf32>
    %48 = arith.mulf %44, %47 : vector<256x8xf32>
    %49 = arith.mulf %48, %48 : vector<256x8xf32>
    %cst_20 = arith.constant dense<0.000000e+00> : vector<256xf32>
    %50 = vector.multi_reduction <add>, %49, %cst_20 [1] : vector<256x8xf32> to vector<256xf32>
    %51 = vector.shape_cast %50 : vector<256xf32> to vector<256x1xf32>
    %cst_21 = arith.constant -5.000000e-01 : f32
    %52 = vector.broadcast %cst_21 : f32 to vector<256x1xf32>
    %53 = arith.mulf %52, %51 : vector<256x1xf32>
    %cst_22 = arith.constant 7.35150814 : f32
    %54 = vector.broadcast %cst_22 : f32 to vector<256x1xf32>
    %55 = arith.subf %53, %54 : vector<256x1xf32>
    %56 = arith.addf %55, %27 : vector<256x1xf32>
    %57 = arith.addf %56, %43 : vector<256x1xf32>
    %c0_23 = arith.constant 0 : index
    %c0_24 = arith.constant 0 : index
    %58 = vector.load %arg3[%c0_23, %c0_24] : memref<256x1xf32, #tpu.memory_space<vmem>>, vector<256x1xf32>
    tpu.vector_store %arg3[%c0_23, %c0_24], %57 {strides = array<i32>} : memref<256x1xf32, #tpu.memory_space<vmem>>, vector<256x1xf32>,
    return
  }
  func.func @transform_0(%arg0: i32) -> (i32, i32) {
    %c0_i32 = arith.constant 0 : i32
    %c0_i32_0 = arith.constant 0 : i32
    return %arg0, %c0_i32 : i32, i32
  }
  func.func @transform_1(%arg0: i32) -> (i32, i32) {
    %c0_i32 = arith.constant 0 : i32
    %c0_i32_0 = arith.constant 0 : i32
    %c0_i32_1 = arith.constant 0 : i32
    return %c0_i32, %c0_i32_0 : i32, i32
  }
  func.func @transform_2(%arg0: i32) -> (i32, i32) {
    %c0_i32 = arith.constant 0 : i32
    %c0_i32_0 = arith.constant 0 : i32
    return %arg0, %c0_i32 : i32, i32
  }
}

</mosaic_0001>

<llo_original>
// kernel: outlier_log_prob.1
$region0: #{outlier_log_prob.1}
  #allocation0 [shape = 'u32[]', space=smem, size = 0x4, offset = 0x4, fixed_abs, tag = 'smem constant byte address 0x4 - core index']
  #allocation1 [shape = 'u32[144,128]{1,0:T(1,128)}', space=vmem, size = 0x12000, scoped, tag = 'internal scratch']
  %s0 = inlined_call_operand.vmem [shape: f32[256,64], index: 0, kind: input, shape index: {}]
  %s1 = inlined_call_operand.vmem [shape: f32[208,128], index: 1, kind: input, shape index: {}]
  %s2 = inlined_call_operand.vmem [shape: f32[256,1], index: 2, kind: output, shape index: {}]
  %s3 = sld [smem:[#allocation0]]
  $region18: #{outlier_log_prob.1} parent=0
    _
  %s5 = ssub.s32 1, %s3
  %s6 = scalar_select 0, %s5, %s3
  // Predicated region
  $region2: #{outlier_log_prob.1} parent=0 // pred_check
    _
  $region3: #{outlier_log_prob.1} parent=0 // pred_check_branch
    %8 = sbr.rel (0) target = $region5
  $region4: #{outlier_log_prob.1} parent=0 // pred_region
    _
  $region5: #{outlier_log_prob.1} parent=0 // pred_fallthru
    _
  // Predicated region
  $region6: #{outlier_log_prob.1} parent=0 // pred_check
    _
  $region7: #{outlier_log_prob.1} parent=0 // pred_check_branch
    %10 = sbr.rel (0) target = $region9
  $region8: #{outlier_log_prob.1} parent=0 // pred_region
    _
  $region9: #{outlier_log_prob.1} parent=0 // pred_fallthru
    _
  %v11 = vld [vmem:[%s0] sm:$0xff]
  %v12 = vld [vmem:[%s0 + $0x8] sm:$0xff]
  %v13 = vld [vmem:[%s0 + $0x10] sm:$0xff]
  %v14 = vld [vmem:[%s0 + $0x18] sm:$0xff]
  %v15 = vld [vmem:[%s0 + $0x20] sm:$0xff]
  %v16 = vld [vmem:[%s0 + $0x28] sm:$0xff]
  %v17 = vld [vmem:[%s0 + $0x30] sm:$0xff]
  %v18 = vld [vmem:[%s0 + $0x38] sm:$0xff]
  %v19 = vld [vmem:[%s0 + $0x40] sm:$0xff]
  %v20 = vld [vmem:[%s0 + $0x48] sm:$0xff]
  %v21 = vld [vmem:[%s0 + $0x50] sm:$0xff]
  %v22 = vld [vmem:[%s0 + $0x58] sm:$0xff]
  %v23 = vld [vmem:[%s0 + $0x60] sm:$0xff]
  %v24 = vld [vmem:[%s0 + $0x68] sm:$0xff]
  %v25 = vld [vmem:[%s0 + $0x70] sm:$0xff]
  %v26 = vld [vmem:[%s0 + $0x78] sm:$0xff]
  %v27 = vld [vmem:[%s0 + $0x80] sm:$0xff]
  %v28 = vld [vmem:[%s0 + $0x88] sm:$0xff]
  %v29 = vld [vmem:[%s0 + $0x90] sm:$0xff]
  %v30 = vld [vmem:[%s0 + $0x98] sm:$0xff]
  %v31 = vld [vmem:[%s0 + $0xa0] sm:$0xff]
  %v32 = vld [vmem:[%s0 + $0xa8] sm:$0xff]
  %v33 = vld [vmem:[%s0 + $0xb0] sm:$0xff]
  %v34 = vld [vmem:[%s0 + $0xb8] sm:$0xff]
  %v35 = vld [vmem:[%s0 + $0xc0] sm:$0xff]
  %v36 = vld [vmem:[%s0 + $0xc8] sm:$0xff]
  %v37 = vld [vmem:[%s0 + $0xd0] sm:$0xff]
  %v38 = vld [vmem:[%s0 + $0xd8] sm:$0xff]
  %v39 = vld [vmem:[%s0 + $0xe0] sm:$0xff]
  %v40 = vld [vmem:[%s0 + $0xe8] sm:$0xff]
  %v41 = vld [vmem:[%s0 + $0xf0] sm:$0xff]
  %v42 = vld [vmem:[%s0 + $0xf8] sm:$0xff]
  %v43 = vld [vmem:[%s1] sm:$0xff]
  %v44 = vld [vmem:[%s1 + $0x8] sm:$0xff]
  %v45 = vld [vmem:[%s1 + $0x10] sm:$0xff]
  %v46 = vld [vmem:[%s1 + $0x18] sm:$0xff]
  %v47 = vld [vmem:[%s1 + $0x20] sm:$0xff]
  %v48 = vld [vmem:[%s1 + $0x28] sm:$0xff]
  %v49 = vld [vmem:[%s1 + $0x30] sm:$0xff]
  %v50 = vld [vmem:[%s1 + $0x38] sm:$0xff]
  %v51 = vld [vmem:[%s1 + $0x40] sm:$0x1]
  %v52 = vld [vmem:[%s1 + $0x48] sm:$0xff]
  %v53 = vld [vmem:[%s1 + $0x50] sm:$0xff]
  %v54 = vld [vmem:[%s1 + $0x58] sm:$0xff]
  %v55 = vld [vmem:[%s1 + $0x60] sm:$0xff]
  %v56 = vld [vmem:[%s1 + $0x68] sm:$0x1]
  %v57 = vld [vmem:[%s1 + $0x70] sm:$0xff]
  %v58 = vld [vmem:[%s1 + $0x78] sm:$0xff]
  %v59 = vld [vmem:[%s1 + $0x80] sm:$0xff]
  %v60 = vld [vmem:[%s1 + $0x88] sm:$0xff]
  %v61 = vld [vmem:[%s1 + $0x90] sm:$0x1]
  %v62 = vld [vmem:[%s1 + $0x98] sm:$0xff]
  %v63 = vld [vmem:[%s1 + $0xa0] sm:$0x1]
  %v64 = vld [vmem:[%s1 + $0xa8] sm:$0xff]
  %v65 = vld [vmem:[%s1 + $0xb0] sm:$0xff]
  %v66 = vld [vmem:[%s1 + $0xb8] sm:$0xff]
  %v67 = vld [vmem:[%s1 + $0xc0] sm:$0xff]
  %v68 = vld [vmem:[%s1 + $0xc8] sm:$0x1]
  %v69 = vlaneseq
  %v70 = vshrl.u32 %v69, 7
  %v71 = vsub.s32 0, %v70
  %v72 = vrot.slane %v51, %v71
  %vm73 = vcmask 523264
  %v75 = vsel %vm73, %v11, 0
  %v78 = vsel %vm73, %v12, 0
  %v81 = vsel %vm73, %v13, 0
  %v84 = vsel %vm73, %v14, 0
  %v87 = vsel %vm73, %v15, 0
  %v90 = vsel %vm73, %v16, 0
  %v93 = vsel %vm73, %v17, 0
  %v96 = vsel %vm73, %v18, 0
  %v99 = vsel %vm73, %v19, 0
  %v102 = vsel %vm73, %v20, 0
  %v105 = vsel %vm73, %v21, 0
  %v108 = vsel %vm73, %v22, 0
  %v111 = vsel %vm73, %v23, 0
  %v114 = vsel %vm73, %v24, 0
  %v117 = vsel %vm73, %v25, 0
  %v120 = vsel %vm73, %v26, 0
  %v123 = vsel %vm73, %v27, 0
  %v126 = vsel %vm73, %v28, 0
  %v129 = vsel %vm73, %v29, 0
  %v132 = vsel %vm73, %v30, 0
  %v135 = vsel %vm73, %v31, 0
  %v138 = vsel %vm73, %v32, 0
  %v141 = vsel %vm73, %v33, 0
  %v144 = vsel %vm73, %v34, 0
  %v147 = vsel %vm73, %v35, 0
  %v150 = vsel %vm73, %v36, 0
  %v153 = vsel %vm73, %v37, 0
  %v156 = vsel %vm73, %v38, 0
  %v159 = vsel %vm73, %v39, 0
  %v162 = vsel %vm73, %v40, 0
  %v165 = vsel %vm73, %v41, 0
  %v168 = vsel %vm73, %v42, 0
  %170 = vmatprep.subr.mxu0 0.0
  %171 = vmatpush1.msra.mxu0 0.0
  %172 = vmatprep.subr.mxu0 0.0
  %173 = vmatpush1.msra.mxu0 0.0
  %174 = vmatprep.subr.mxu0 0.0
  %175 = vmatpush1.msra.mxu0 0.0
  %176 = vmatprep.subr.mxu0 0.0
  %177 = vmatpush1.msra.mxu0 0.0
  %178 = vmatprep.subr.mxu0 0.0
  %179 = vmatpush1.msra.mxu0 0.0
  %180 = vmatprep.subr.mxu0 0.0
  %181 = vmatpush1.msra.mxu0 0.0
  %182 = vmatprep.subr.mxu0 0.0
  %183 = vmatpush1.msra.mxu0 0.0
  %184 = vmatprep.subr.mxu0 0.0
  %185 = vmatpush1.msra.mxu0 0.0
  %186 = vmatprep.subr.mxu0 0.0
  %187 = vmatpush1.msra.mxu0 %v50
  %188 = vmatprep.subr.mxu0 0.0
  %189 = vmatpush1.msra.mxu0 %v49
  %190 = vmatprep.subr.mxu0 0.0
  %191 = vmatpush1.msra.mxu0 %v48
  %192 = vmatprep.subr.mxu0 0.0
  %193 = vmatpush1.msra.mxu0 %v47
  %194 = vmatprep.subr.mxu0 0.0
  %195 = vmatpush1.msra.mxu0 %v46
  %196 = vmatprep.subr.mxu0 0.0
  %197 = vmatpush1.msra.mxu0 %v45
  %198 = vmatprep.subr.mxu0 0.0
  %199 = vmatpush1.msra.mxu0 %v44
  %200 = vmatprep.subr.mxu0 0.0
  %201 = vmatpush1.msra.mxu0 %v43
  %202 = vmatprep.subr.mxu0 0.0
  %203 = vmatpush2.msra.mxu0 0.0
  %204 = vmatprep.subr.mxu0 0.0
  %205 = vmatpush2.msra.mxu0 0.0
  %206 = vmatprep.subr.mxu0 0.0
  %207 = vmatpush2.msra.mxu0 0.0
  %208 = vmatprep.subr.mxu0 0.0
  %209 = vmatpush2.msra.mxu0 0.0
  %210 = vmatprep.subr.mxu0 0.0
  %211 = vmatpush2.msra.mxu0 0.0
  %212 = vmatprep.subr.mxu0 0.0
  %213 = vmatpush2.msra.mxu0 0.0
  %214 = vmatprep.subr.mxu0 0.0
  %215 = vmatpush2.msra.mxu0 0.0
  %216 = vmatprep.subr.mxu0 0.0
  %217 = vmatpush2.msra.mxu0 0.0
  %218 = vmatprep.subr.mxu0 0.0
  %219 = vmatpush2.msra.mxu0 0.0
  %220 = vmatprep.subr.mxu0 0.0
  %221 = vmatpush2.msra.mxu0 0.0
  %222 = vmatprep.subr.mxu0 0.0
  %223 = vmatpush2.msra.mxu0 0.0
  %224 = vmatprep.subr.mxu0 0.0
  %225 = vmatpush2.msra.mxu0 0.0
  %226 = vmatprep.subr.mxu0 0.0
  %227 = vmatpush2.msra.mxu0 0.0
  %228 = vmatprep.subr.mxu0 0.0
  %229 = vmatpush2.msra.mxu0 0.0
  %230 = vmatprep.subr.mxu0 0.0
  %231 = vmatpush2.msra.mxu0 0.0
  %232 = vmatprep.subr.mxu0 0.0
  %233 = vmatpush2.msra.mxu0 0.0
  %234 = vmatprep.mubr.f32.mxu0 0.0
  %235 = vmatmul.mubr.f32.gmra.mxu0 %v75
  %v236 = vpop.f32.mrf.mxu0
  %v237 = vadd.f32 %v72, %v236
  %v238 = vpop.f32.mrf.mxu0
  %239 = vmatprep.mubr.f32.mxu0 0.0
  %240 = vmatmul.mubr.f32.gmra.mxu0 %v78
  %v241 = vpop.f32.mrf.mxu0
  %v242 = vadd.f32 %v72, %v241
  %v243 = vpop.f32.mrf.mxu0
  %244 = vmatprep.mubr.f32.mxu0 0.0
  %245 = vmatmul.mubr.f32.gmra.mxu0 %v81
  %v246 = vpop.f32.mrf.mxu0
  %v247 = vadd.f32 %v72, %v246
  %v248 = vpop.f32.mrf.mxu0
  %249 = vmatprep.mubr.f32.mxu0 0.0
  %250 = vmatmul.mubr.f32.gmra.mxu0 %v84
  %v251 = vpop.f32.mrf.mxu0
  %v252 = vadd.f32 %v72, %v251
  %v253 = vpop.f32.mrf.mxu0
  %254 = vmatprep.mubr.f32.mxu0 0.0
  %255 = vmatmul.mubr.f32.gmra.mxu0 %v87
  %v256 = vpop.f32.mrf.mxu0
  %v257 = vadd.f32 %v72, %v256
  %v258 = vpop.f32.mrf.mxu0
  %259 = vmatprep.mubr.f32.mxu0 0.0
  %260 = vmatmul.mubr.f32.gmra.mxu0 %v90
  %v261 = vpop.f32.mrf.mxu0
  %v262 = vadd.f32 %v72, %v261
  %v263 = vpop.f32.mrf.mxu0
  %264 = vmatprep.mubr.f32.mxu0 0.0
  %265 = vmatmul.mubr.f32.gmra.mxu0 %v93
  %v266 = vpop.f32.mrf.mxu0
  %v267 = vadd.f32 %v72, %v266
  %v268 = vpop.f32.mrf.mxu0
  %269 = vmatprep.mubr.f32.mxu0 0.0
  %270 = vmatmul.mubr.f32.gmra.mxu0 %v96
  %v271 = vpop.f32.mrf.mxu0
  %v272 = vadd.f32 %v72, %v271
  %v273 = vpop.f32.mrf.mxu0
  %274 = vmatprep.mubr.f32.mxu0 0.0
  %275 = vmatmul.mubr.f32.gmra.mxu0 %v99
  %v276 = vpop.f32.mrf.mxu0
  %v277 = vadd.f32 %v72, %v276
  %v278 = vpop.f32.mrf.mxu0
  %279 = vmatprep.mubr.f32.mxu0 0.0
  %280 = vmatmul.mubr.f32.gmra.mxu0 %v102
  %v281 = vpop.f32.mrf.mxu0
  %v282 = vadd.f32 %v72, %v281
  %v283 = vpop.f32.mrf.mxu0
  %284 = vmatprep.mubr.f32.mxu0 0.0
  %285 = vmatmul.mubr.f32.gmra.mxu0 %v105
  %v286 = vpop.f32.mrf.mxu0
  %v287 = vadd.f32 %v72, %v286
  %v288 = vpop.f32.mrf.mxu0
  %289 = vmatprep.mubr.f32.mxu0 0.0
  %290 = vmatmul.mubr.f32.gmra.mxu0 %v108
  %v291 = vpop.f32.mrf.mxu0
  %v292 = vadd.f32 %v72, %v291
  %v293 = vpop.f32.mrf.mxu0
  %294 = vmatprep.mubr.f32.mxu0 0.0
  %295 = vmatmul.mubr.f32.gmra.mxu0 %v111
  %v296 = vpop.f32.mrf.mxu0
  %v297 = vadd.f32 %v72, %v296
  %v298 = vpop.f32.mrf.mxu0
  %299 = vmatprep.mubr.f32.mxu0 0.0
  %300 = vmatmul.mubr.f32.gmra.mxu0 %v114
  %v301 = vpop.f32.mrf.mxu0
  %v302 = vadd.f32 %v72, %v301
  %v303 = vpop.f32.mrf.mxu0
  %304 = vmatprep.mubr.f32.mxu0 0.0
  %305 = vmatmul.mubr.f32.gmra.mxu0 %v117
  %v306 = vpop.f32.mrf.mxu0
  %v307 = vadd.f32 %v72, %v306
  %v308 = vpop.f32.mrf.mxu0
  %309 = vmatprep.mubr.f32.mxu0 0.0
  %310 = vmatmul.mubr.f32.gmra.mxu0 %v120
  %v311 = vpop.f32.mrf.mxu0
  %v312 = vadd.f32 %v72, %v311
  %v313 = vpop.f32.mrf.mxu0
  %314 = vmatprep.mubr.f32.mxu0 0.0
  %315 = vmatmul.mubr.f32.gmra.mxu0 %v123
  %v316 = vpop.f32.mrf.mxu0
  %v317 = vadd.f32 %v72, %v316
  %v318 = vpop.f32.mrf.mxu0
  %319 = vmatprep.mubr.f32.mxu0 0.0
  %320 = vmatmul.mubr.f32.gmra.mxu0 %v126
  %v321 = vpop.f32.mrf.mxu0
  %v322 = vadd.f32 %v72, %v321
  %v323 = vpop.f32.mrf.mxu0
  %324 = vmatprep.mubr.f32.mxu0 0.0
  %325 = vmatmul.mubr.f32.gmra.mxu0 %v129
  %v326 = vpop.f32.mrf.mxu0
  %v327 = vadd.f32 %v72, %v326
  %v328 = vpop.f32.mrf.mxu0
  %329 = vmatprep.mubr.f32.mxu0 0.0
  %330 = vmatmul.mubr.f32.gmra.mxu0 %v132
  %v331 = vpop.f32.mrf.mxu0
  %v332 = vadd.f32 %v72, %v331
  %v333 = vpop.f32.mrf.mxu0
  %334 = vmatprep.mubr.f32.mxu0 0.0
  %335 = vmatmul.mubr.f32.gmra.mxu0 %v135
  %v336 = vpop.f32.mrf.mxu0
  %v337 = vadd.f32 %v72, %v336
  %v338 = vpop.f32.mrf.mxu0
  %339 = vmatprep.mubr.f32.mxu0 0.0
  %340 = vmatmul.mubr.f32.gmra.mxu0 %v138
  %v341 = vpop.f32.mrf.mxu0
  %v342 = vadd.f32 %v72, %v341
  %v343 = vpop.f32.mrf.mxu0
  %344 = vmatprep.mubr.f32.mxu0 0.0
  %345 = vmatmul.mubr.f32.gmra.mxu0 %v141
  %v346 = vpop.f32.mrf.mxu0
  %v347 = vadd.f32 %v72, %v346
  %v348 = vpop.f32.mrf.mxu0
  %349 = vmatprep.mubr.f32.mxu0 0.0
  %350 = vmatmul.mubr.f32.gmra.mxu0 %v144
  %v351 = vpop.f32.mrf.mxu0
  %v352 = vadd.f32 %v72, %v351
  %v353 = vpop.f32.mrf.mxu0
  %354 = vmatprep.mubr.f32.mxu0 0.0
  %355 = vmatmul.mubr.f32.gmra.mxu0 %v147
  %v356 = vpop.f32.mrf.mxu0
  %v357 = vadd.f32 %v72, %v356
  %v358 = vpop.f32.mrf.mxu0
  %359 = vmatprep.mubr.f32.mxu0 0.0
  %360 = vmatmul.mubr.f32.gmra.mxu0 %v150
  %v361 = vpop.f32.mrf.mxu0
  %v362 = vadd.f32 %v72, %v361
  %v363 = vpop.f32.mrf.mxu0
  %364 = vmatprep.mubr.f32.mxu0 0.0
  %365 = vmatmul.mubr.f32.gmra.mxu0 %v153
  %v366 = vpop.f32.mrf.mxu0
  %v367 = vadd.f32 %v72, %v366
  %v368 = vpop.f32.mrf.mxu0
  %369 = vmatprep.mubr.f32.mxu0 0.0
  %370 = vmatmul.mubr.f32.gmra.mxu0 %v156
  %v371 = vpop.f32.mrf.mxu0
  %v372 = vadd.f32 %v72, %v371
  %v373 = vpop.f32.mrf.mxu0
  %374 = vmatprep.mubr.f32.mxu0 0.0
  %375 = vmatmul.mubr.f32.gmra.mxu0 %v159
  %v376 = vpop.f32.mrf.mxu0
  %v377 = vadd.f32 %v72, %v376
  %v378 = vpop.f32.mrf.mxu0
  %379 = vmatprep.mubr.f32.mxu0 0.0
  %380 = vmatmul.mubr.f32.gmra.mxu0 %v162
  %v381 = vpop.f32.mrf.mxu0
  %v382 = vadd.f32 %v72, %v381
  %v383 = vpop.f32.mrf.mxu0
  %384 = vmatprep.mubr.f32.mxu0 0.0
  %385 = vmatmul.mubr.f32.gmra.mxu0 %v165
  %v386 = vpop.f32.mrf.mxu0
  %v387 = vadd.f32 %v72, %v386
  %v388 = vpop.f32.mrf.mxu0
  %389 = vmatprep.mubr.f32.mxu0 0.0
  %390 = vmatmul.mubr.f32.gmra.mxu0 %v168
  %v391 = vpop.f32.mrf.mxu0
  %v392 = vadd.f32 %v72, %v391
  %v393 = vpop.f32.mrf.mxu0
  %394 = vdwg.mxu0
  %v395 = vtanh.pop %v237
  %v396 = vtanh.pop %v242
  %v397 = vtanh.pop %v247
  %v398 = vtanh.pop %v252
  %v399 = vtanh.pop %v257
  %v400 = vtanh.pop %v262
  %v401 = vtanh.pop %v267
  %v402 = vtanh.pop %v272
  %v403 = vtanh.pop %v277
  %v404 = vtanh.pop %v282
  %v405 = vtanh.pop %v287
  %v406 = vtanh.pop %v292
  %v407 = vtanh.pop %v297
  %v408 = vtanh.pop %v302
  %v409 = vtanh.pop %v307
  %v410 = vtanh.pop %v312
  %v411 = vtanh.pop %v317
  %v412 = vtanh.pop %v322
  %v413 = vtanh.pop %v327
  %v414 = vtanh.pop %v332
  %v415 = vtanh.pop %v337
  %v416 = vtanh.pop %v342
  %v417 = vtanh.pop %v347
  %v418 = vtanh.pop %v352
  %v419 = vtanh.pop %v357
  %v420 = vtanh.pop %v362
  %v421 = vtanh.pop %v367
  %v422 = vtanh.pop %v372
  %v423 = vtanh.pop %v377
  %v424 = vtanh.pop %v382
  %v425 = vtanh.pop %v387
  %v426 = vtanh.pop %v392
  %v427 = vlaneseq
  %v428 = vshrl.u32 %v427, 7
  %v429 = vsub.s32 0, %v428
  %v430 = vrot.slane %v56, %v429
  %vm431 = vcmask 261120
  %v433 = vsel %vm431, %v395, 0
  %v436 = vsel %vm431, %v396, 0
  %v439 = vsel %vm431, %v397, 0
  %v442 = vsel %vm431, %v398, 0
  %v445 = vsel %vm431, %v399, 0
  %v448 = vsel %vm431, %v400, 0
  %v451 = vsel %vm431, %v401, 0
  %v454 = vsel %vm431, %v402, 0
  %v457 = vsel %vm431, %v403, 0
  %v460 = vsel %vm431, %v404, 0
  %v463 = vsel %vm431, %v405, 0
  %v466 = vsel %vm431, %v406, 0
  %v469 = vsel %vm431, %v407, 0
  %v472 = vsel %vm431, %v408, 0
  %v475 = vsel %vm431, %v409, 0
  %v478 = vsel %vm431, %v410, 0
  %v481 = vsel %vm431, %v411, 0
  %v484 = vsel %vm431, %v412, 0
  %v487 = vsel %vm431, %v413, 0
  %v490 = vsel %vm431, %v414, 0
  %v493 = vsel %vm431, %v415, 0
  %v496 = vsel %vm431, %v416, 0
  %v499 = vsel %vm431, %v417, 0
  %v502 = vsel %vm431, %v418, 0
  %v505 = vsel %vm431, %v419, 0
  %v508 = vsel %vm431, %v420, 0
  %v511 = vsel %vm431, %v421, 0
  %v514 = vsel %vm431, %v422, 0
  %v517 = vsel %vm431, %v423, 0
  %v520 = vsel %vm431, %v424, 0
  %v523 = vsel %vm431, %v425, 0
  %v526 = vsel %vm431, %v426, 0
  %528 = vmatprep.subr.mxu0 0.0
  %529 = vmatpush1.msra.mxu0 0.0
  %530 = vmatprep.subr.mxu0 0.0
  %531 = vmatpush1.msra.mxu0 0.0
  %532 = vmatprep.subr.mxu0 0.0
  %533 = vmatpush1.msra.mxu0 0.0
  %534 = vmatprep.subr.mxu0 0.0
  %535 = vmatpush1.msra.mxu0 0.0
  %536 = vmatprep.subr.mxu0 0.0
  %537 = vmatpush1.msra.mxu0 0.0
  %538 = vmatprep.subr.mxu0 0.0
  %539 = vmatpush1.msra.mxu0 0.0
  %540 = vmatprep.subr.mxu0 0.0
  %541 = vmatpush1.msra.mxu0 0.0
  %542 = vmatprep.subr.mxu0 0.0
  %543 = vmatpush1.msra.mxu0 0.0
  %544 = vmatprep.subr.mxu0 0.0
  %545 = vmatpush1.msra.mxu0 0.0
  %546 = vmatprep.subr.mxu0 0.0
  %547 = vmatpush1.msra.mxu0 0.0
  %548 = vmatprep.subr.mxu0 0.0
  %549 = vmatpush1.msra.mxu0 0.0
  %550 = vmatprep.subr.mxu0 0.0
  %551 = vmatpush1.msra.mxu0 0.0
  %552 = vmatprep.subr.mxu0 0.0
  %553 = vmatpush1.msra.mxu0 %v55
  %554 = vmatprep.subr.mxu0 0.0
  %555 = vmatpush1.msra.mxu0 %v54
  %556 = vmatprep.subr.mxu0 0.0
  %557 = vmatpush1.msra.mxu0 %v53
  %558 = vmatprep.subr.mxu0 0.0
  %559 = vmatpush1.msra.mxu0 %v52
  %560 = vmatprep.subr.mxu0 0.0
  %561 = vmatpush2.msra.mxu0 0.0
  %562 = vmatprep.subr.mxu0 0.0
  %563 = vmatpush2.msra.mxu0 0.0
  %564 = vmatprep.subr.mxu0 0.0
  %565 = vmatpush2.msra.mxu0 0.0
  %566 = vmatprep.subr.mxu0 0.0
  %567 = vmatpush2.msra.mxu0 0.0
  %568 = vmatprep.subr.mxu0 0.0
  %569 = vmatpush2.msra.mxu0 0.0
  %570 = vmatprep.subr.mxu0 0.0
  %571 = vmatpush2.msra.mxu0 0.0
  %572 = vmatprep.subr.mxu0 0.0
  %573 = vmatpush2.msra.mxu0 0.0
  %574 = vmatprep.subr.mxu0 0.0
  %575 = vmatpush2.msra.mxu0 0.0
  %576 = vmatprep.subr.mxu0 0.0
  %577 = vmatpush2.msra.mxu0 0.0
  %578 = vmatprep.subr.mxu0 0.0
  %579 = vmatpush2.msra.mxu0 0.0
  %580 = vmatprep.subr.mxu0 0.0
  %581 = vmatpush2.msra.mxu0 0.0
  %582 = vmatprep.subr.mxu0 0.0
  %583 = vmatpush2.msra.mxu0 0.0
  %584 = vmatprep.subr.mxu0 0.0
  %585 = vmatpush2.msra.mxu0 0.0
  %586 = vmatprep.subr.mxu0 0.0
  %587 = vmatpush2.msra.mxu0 0.0
  %588 = vmatprep.subr.mxu0 0.0
  %589 = vmatpush2.msra.mxu0 0.0
  %590 = vmatprep.subr.mxu0 0.0
  %591 = vmatpush2.msra.mxu0 0.0
  %592 = vmatprep.mubr.f32.mxu0 0.0
  %593 = vmatmul.mubr.f32.gmra.mxu0 %v433
  %v594 = vpop.f32.mrf.mxu0
  %v595 = vadd.f32 %v430, %v594
  %v596 = vpop.f32.mrf.mxu0
  %597 = vmatprep.mubr.f32.mxu0 0.0
  %598 = vmatmul.mubr.f32.gmra.mxu0 %v436
  %v599 = vpop.f32.mrf.mxu0
  %v600 = vadd.f32 %v430, %v599
  %v601 = vpop.f32.mrf.mxu0
  %602 = vmatprep.mubr.f32.mxu0 0.0
  %603 = vmatmul.mubr.f32.gmra.mxu0 %v439
  %v604 = vpop.f32.mrf.mxu0
  %v605 = vadd.f32 %v430, %v604
  %v606 = vpop.f32.mrf.mxu0
  %607 = vmatprep.mubr.f32.mxu0 0.0
  %608 = vmatmul.mubr.f32.gmra.mxu0 %v442
  %v609 = vpop.f32.mrf.mxu0
  %v610 = vadd.f32 %v430, %v609
  %v611 = vpop.f32.mrf.mxu0
  %612 = vmatprep.mubr.f32.mxu0 0.0
  %613 = vmatmul.mubr.f32.gmra.mxu0 %v445
  %v614 = vpop.f32.mrf.mxu0
  %v615 = vadd.f32 %v430, %v614
  %v616 = vpop.f32.mrf.mxu0
  %617 = vmatprep.mubr.f32.mxu0 0.0
  %618 = vmatmul.mubr.f32.gmra.mxu0 %v448
  %v619 = vpop.f32.mrf.mxu0
  %v620 = vadd.f32 %v430, %v619
  %v621 = vpop.f32.mrf.mxu0
  %622 = vmatprep.mubr.f32.mxu0 0.0
  %623 = vmatmul.mubr.f32.gmra.mxu0 %v451
  %v624 = vpop.f32.mrf.mxu0
  %v625 = vadd.f32 %v430, %v624
  %v626 = vpop.f32.mrf.mxu0
  %627 = vmatprep.mubr.f32.mxu0 0.0
  %628 = vmatmul.mubr.f32.gmra.mxu0 %v454
  %v629 = vpop.f32.mrf.mxu0
  %v630 = vadd.f32 %v430, %v629
  %v631 = vpop.f32.mrf.mxu0
  %632 = vmatprep.mubr.f32.mxu0 0.0
  %633 = vmatmul.mubr.f32.gmra.mxu0 %v457
  %v634 = vpop.f32.mrf.mxu0
  %v635 = vadd.f32 %v430, %v634
  %v636 = vpop.f32.mrf.mxu0
  %637 = vmatprep.mubr.f32.mxu0 0.0
  %638 = vmatmul.mubr.f32.gmra.mxu0 %v460
  %v639 = vpop.f32.mrf.mxu0
  %v640 = vadd.f32 %v430, %v639
  %v641 = vpop.f32.mrf.mxu0
  %642 = vmatprep.mubr.f32.mxu0 0.0
  %643 = vmatmul.mubr.f32.gmra.mxu0 %v463
  %v644 = vpop.f32.mrf.mxu0
  %v645 = vadd.f32 %v430, %v644
  %v646 = vpop.f32.mrf.mxu0
  %647 = vmatprep.mubr.f32.mxu0 0.0
  %648 = vmatmul.mubr.f32.gmra.mxu0 %v466
  %v649 = vpop.f32.mrf.mxu0
  %v650 = vadd.f32 %v430, %v649
  %v651 = vpop.f32.mrf.mxu0
  %652 = vmatprep.mubr.f32.mxu0 0.0
  %653 = vmatmul.mubr.f32.gmra.mxu0 %v469
  %v654 = vpop.f32.mrf.mxu0
  %v655 = vadd.f32 %v430, %v654
  %v656 = vpop.f32.mrf.mxu0
  %657 = vmatprep.mubr.f32.mxu0 0.0
  %658 = vmatmul.mubr.f32.gmra.mxu0 %v472
  %v659 = vpop.f32.mrf.mxu0
  %v660 = vadd.f32 %v430, %v659
  %v661 = vpop.f32.mrf.mxu0
  %662 = vmatprep.mubr.f32.mxu0 0.0
  %663 = vmatmul.mubr.f32.gmra.mxu0 %v475
  %v664 = vpop.f32.mrf.mxu0
  %v665 = vadd.f32 %v430, %v664
  %v666 = vpop.f32.mrf.mxu0
  %667 = vmatprep.mubr.f32.mxu0 0.0
  %668 = vmatmul.mubr.f32.gmra.mxu0 %v478
  %v669 = vpop.f32.mrf.mxu0
  %v670 = vadd.f32 %v430, %v669
  %v671 = vpop.f32.mrf.mxu0
  %672 = vmatprep.mubr.f32.mxu0 0.0
  %673 = vmatmul.mubr.f32.gmra.mxu0 %v481
  %v674 = vpop.f32.mrf.mxu0
  %v675 = vadd.f32 %v430, %v674
  %v676 = vpop.f32.mrf.mxu0
  %677 = vmatprep.mubr.f32.mxu0 0.0
  %678 = vmatmul.mubr.f32.gmra.mxu0 %v484
  %v679 = vpop.f32.mrf.mxu0
  %v680 = vadd.f32 %v430, %v679
  %v681 = vpop.f32.mrf.mxu0
  %682 = vmatprep.mubr.f32.mxu0 0.0
  %683 = vmatmul.mubr.f32.gmra.mxu0 %v487
  %v684 = vpop.f32.mrf.mxu0
  %v685 = vadd.f32 %v430, %v684
  %v686 = vpop.f32.mrf.mxu0
  %687 = vmatprep.mubr.f32.mxu0 0.0
  %688 = vmatmul.mubr.f32.gmra.mxu0 %v490
  %v689 = vpop.f32.mrf.mxu0
  %v690 = vadd.f32 %v430, %v689
  %v691 = vpop.f32.mrf.mxu0
  %692 = vmatprep.mubr.f32.mxu0 0.0
  %693 = vmatmul.mubr.f32.gmra.mxu0 %v493
  %v694 = vpop.f32.mrf.mxu0
  %v695 = vadd.f32 %v430, %v694
  %v696 = vpop.f32.mrf.mxu0
  %697 = vmatprep.mubr.f32.mxu0 0.0
  %698 = vmatmul.mubr.f32.gmra.mxu0 %v496
  %v699 = vpop.f32.mrf.mxu0
  %v700 = vadd.f32 %v430, %v699
  %v701 = vpop.f32.mrf.mxu0
  %702 = vmatprep.mubr.f32.mxu0 0.0
  %703 = vmatmul.mubr.f32.gmra.mxu0 %v499
  %v704 = vpop.f32.mrf.mxu0
  %v705 = vadd.f32 %v430, %v704
  %v706 = vpop.f32.mrf.mxu0
  %707 = vmatprep.mubr.f32.mxu0 0.0
  %708 = vmatmul.mubr.f32.gmra.mxu0 %v502
  %v709 = vpop.f32.mrf.mxu0
  %v710 = vadd.f32 %v430, %v709
  %v711 = vpop.f32.mrf.mxu0
  %712 = vmatprep.mubr.f32.mxu0 0.0
  %713 = vmatmul.mubr.f32.gmra.mxu0 %v505
  %v714 = vpop.f32.mrf.mxu0
  %v715 = vadd.f32 %v430, %v714
  %v716 = vpop.f32.mrf.mxu0
  %717 = vmatprep.mubr.f32.mxu0 0.0
  %718 = vmatmul.mubr.f32.gmra.mxu0 %v508
  %v719 = vpop.f32.mrf.mxu0
  %v720 = vadd.f32 %v430, %v719
  %v721 = vpop.f32.mrf.mxu0
  %722 = vmatprep.mubr.f32.mxu0 0.0
  %723 = vmatmul.mubr.f32.gmra.mxu0 %v511
  %v724 = vpop.f32.mrf.mxu0
  %v725 = vadd.f32 %v430, %v724
  %v726 = vpop.f32.mrf.mxu0
  %727 = vmatprep.mubr.f32.mxu0 0.0
  %728 = vmatmul.mubr.f32.gmra.mxu0 %v514
  %v729 = vpop.f32.mrf.mxu0
  %v730 = vadd.f32 %v430, %v729
  %v731 = vpop.f32.mrf.mxu0
  %732 = vmatprep.mubr.f32.mxu0 0.0
  %733 = vmatmul.mubr.f32.gmra.mxu0 %v517
  %v734 = vpop.f32.mrf.mxu0
  %v735 = vadd.f32 %v430, %v734
  %v736 = vpop.f32.mrf.mxu0
  %737 = vmatprep.mubr.f32.mxu0 0.0
  %738 = vmatmul.mubr.f32.gmra.mxu0 %v520
  %v739 = vpop.f32.mrf.mxu0
  %v740 = vadd.f32 %v430, %v739
  %v741 = vpop.f32.mrf.mxu0
  %742 = vmatprep.mubr.f32.mxu0 0.0
  %743 = vmatmul.mubr.f32.gmra.mxu0 %v523
  %v744 = vpop.f32.mrf.mxu0
  %v745 = vadd.f32 %v430, %v744
  %v746 = vpop.f32.mrf.mxu0
  %747 = vmatprep.mubr.f32.mxu0 0.0
  %748 = vmatmul.mubr.f32.gmra.mxu0 %v526
  %v749 = vpop.f32.mrf.mxu0
  %v750 = vadd.f32 %v430, %v749
  %v751 = vpop.f32.mrf.mxu0
  %752 = vdwg.mxu0
  %v753 = vmax.f32 %v595, 0.0
  %v754 = vmax.f32 %v600, 0.0
  %v755 = vmax.f32 %v605, 0.0
  %v756 = vmax.f32 %v610, 0.0
  %v757 = vmax.f32 %v615, 0.0
  %v758 = vmax.f32 %v620, 0.0
  %v759 = vmax.f32 %v625, 0.0
  %v760 = vmax.f32 %v630, 0.0
  %v761 = vmax.f32 %v635, 0.0
  %v762 = vmax.f32 %v640, 0.0
  %v763 = vmax.f32 %v645, 0.0
  %v764 = vmax.f32 %v650, 0.0
  %v765 = vmax.f32 %v655, 0.0
  %v766 = vmax.f32 %v660, 0.0
  %v767 = vmax.f32 %v665, 0.0
  %v768 = vmax.f32 %v670, 0.0
  %v769 = vmax.f32 %v675, 0.0
  %v770 = vmax.f32 %v680, 0.0
  %v771 = vmax.f32 %v685, 0.0
  %v772 = vmax.f32 %v690, 0.0
  %v773 = vmax.f32 %v695, 0.0
  %v774 = vmax.f32 %v700, 0.0
  %v775 = vmax.f32 %v705, 0.0
  %v776 = vmax.f32 %v710, 0.0
  %v777 = vmax.f32 %v715, 0.0
  %v778 = vmax.f32 %v720, 0.0
  %v779 = vmax.f32 %v725, 0.0
  %v780 = vmax.f32 %v730, 0.0
  %v781 = vmax.f32 %v735, 0.0
  %v782 = vmax.f32 %v740, 0.0
  %v783 = vmax.f32 %v745, 0.0
  %v784 = vmax.f32 %v750, 0.0
  %v785 = vlaneseq
  %v786 = vshrl.u32 %v785, 7
  %v787 = vsub.s32 0, %v786
  %v788 = vrot.slane %v61, %v787
  %821 = vrot.lane.b32.xlu0 %v753, 120
  %v822 = vpop.permute.xlu0 %821
  %823 = vrot.lane.b32.xlu0 %v754, 120
  %v824 = vpop.permute.xlu0 %823
  %825 = vrot.lane.b32.xlu0 %v755, 120
  %v826 = vpop.permute.xlu0 %825
  %827 = vrot.lane.b32.xlu0 %v756, 120
  %v828 = vpop.permute.xlu0 %827
  %829 = vrot.lane.b32.xlu0 %v757, 120
  %v830 = vpop.permute.xlu0 %829
  %831 = vrot.lane.b32.xlu0 %v758, 120
  %v832 = vpop.permute.xlu0 %831
  %833 = vrot.lane.b32.xlu0 %v759, 120
  %v834 = vpop.permute.xlu0 %833
  %835 = vrot.lane.b32.xlu0 %v760, 120
  %v836 = vpop.permute.xlu0 %835
  %837 = vrot.lane.b32.xlu0 %v761, 120
  %v838 = vpop.permute.xlu0 %837
  %839 = vrot.lane.b32.xlu0 %v762, 120
  %v840 = vpop.permute.xlu0 %839
  %841 = vrot.lane.b32.xlu0 %v763, 120
  %v842 = vpop.permute.xlu0 %841
  %843 = vrot.lane.b32.xlu0 %v764, 120
  %v844 = vpop.permute.xlu0 %843
  %845 = vrot.lane.b32.xlu0 %v765, 120
  %v846 = vpop.permute.xlu0 %845
  %847 = vrot.lane.b32.xlu0 %v766, 120
  %v848 = vpop.permute.xlu0 %847
  %849 = vrot.lane.b32.xlu0 %v767, 120
  %v850 = vpop.permute.xlu0 %849
  %851 = vrot.lane.b32.xlu0 %v768, 120
  %v852 = vpop.permute.xlu0 %851
  %853 = vrot.lane.b32.xlu0 %v769, 120
  %v854 = vpop.permute.xlu0 %853
  %855 = vrot.lane.b32.xlu0 %v770, 120
  %v856 = vpop.permute.xlu0 %855
  %857 = vrot.lane.b32.xlu0 %v771, 120
  %v858 = vpop.permute.xlu0 %857
  %859 = vrot.lane.b32.xlu0 %v772, 120
  %v860 = vpop.permute.xlu0 %859
  %861 = vrot.lane.b32.xlu0 %v773, 120
  %v862 = vpop.permute.xlu0 %861
  %863 = vrot.lane.b32.xlu0 %v774, 120
  %v864 = vpop.permute.xlu0 %863
  %865 = vrot.lane.b32.xlu0 %v775, 120
  %v866 = vpop.permute.xlu0 %865
  %867 = vrot.lane.b32.xlu0 %v776, 120
  %v868 = vpop.permute.xlu0 %867
  %869 = vrot.lane.b32.xlu0 %v777, 120
  %v870 = vpop.permute.xlu0 %869
  %871 = vrot.lane.b32.xlu0 %v778, 120
  %v872 = vpop.permute.xlu0 %871
  %873 = vrot.lane.b32.xlu0 %v779, 120
  %v874 = vpop.permute.xlu0 %873
  %875 = vrot.lane.b32.xlu0 %v780, 120
  %v876 = vpop.permute.xlu0 %875
  %877 = vrot.lane.b32.xlu0 %v781, 120
  %v878 = vpop.permute.xlu0 %877
  %879 = vrot.lane.b32.xlu0 %v782, 120
  %v880 = vpop.permute.xlu0 %879
  %881 = vrot.lane.b32.xlu0 %v783, 120
  %v882 = vpop.permute.xlu0 %881
  %883 = vrot.lane.b32.xlu0 %v784, 120
  %v884 = vpop.permute.xlu0 %883
  %v885 = vsel %vm431, %v822, 0
  %v887 = vsel %vm431, %v824, 0
  %v889 = vsel %vm431, %v826, 0
  %v891 = vsel %vm431, %v828, 0
  %v893 = vsel %vm431, %v830, 0
  %v895 = vsel %vm431, %v832, 0
  %v897 = vsel %vm431, %v834, 0
  %v899 = vsel %vm431, %v836, 0
  %v901 = vsel %vm431, %v838, 0
  %v903 = vsel %vm431, %v840, 0
  %v905 = vsel %vm431, %v842, 0
  %v907 = vsel %vm431, %v844, 0
  %v909 = vsel %vm431, %v846, 0
  %v911 = vsel %vm431, %v848, 0
  %v913 = vsel %vm431, %v850, 0
  %v915 = vsel %vm431, %v852, 0
  %v917 = vsel %vm431, %v854, 0
  %v919 = vsel %vm431, %v856, 0
  %v921 = vsel %vm431, %v858, 0
  %v923 = vsel %vm431, %v860, 0
  %v925 = vsel %vm431, %v862, 0
  %v927 = vsel %vm431, %v864, 0
  %v929 = vsel %vm431, %v866, 0
  %v931 = vsel %vm431, %v868, 0
  %v933 = vsel %vm431, %v870, 0
  %v935 = vsel %vm431, %v872, 0
  %v937 = vsel %vm431, %v874, 0
  %v939 = vsel %vm431, %v876, 0
  %v941 = vsel %vm431, %v878, 0
  %v943 = vsel %vm431, %v880, 0
  %v945 = vsel %vm431, %v882, 0
  %v947 = vsel %vm431, %v884, 0
  %949 = vmatprep.subr.mxu0 0.0
  %950 = vmatpush1.msra.mxu0 0.0
  %951 = vmatprep.subr.mxu0 0.0
  %952 = vmatpush1.msra.mxu0 0.0
  %953 = vmatprep.subr.mxu0 0.0
  %954 = vmatpush1.msra.mxu0 0.0
  %955 = vmatprep.subr.mxu0 0.0
  %956 = vmatpush1.msra.mxu0 0.0
  %957 = vmatprep.subr.mxu0 0.0
  %958 = vmatpush1.msra.mxu0 0.0
  %959 = vmatprep.subr.mxu0 0.0
  %960 = vmatpush1.msra.mxu0 0.0
  %961 = vmatprep.subr.mxu0 0.0
  %962 = vmatpush1.msra.mxu0 0.0
  %963 = vmatprep.subr.mxu0 0.0
  %964 = vmatpush1.msra.mxu0 0.0
  %965 = vmatprep.subr.mxu0 0.0
  %966 = vmatpush1.msra.mxu0 0.0
  %967 = vmatprep.subr.mxu0 0.0
  %968 = vmatpush1.msra.mxu0 0.0
  %969 = vmatprep.subr.mxu0 0.0
  %970 = vmatpush1.msra.mxu0 0.0
  %971 = vmatprep.subr.mxu0 0.0
  %972 = vmatpush1.msra.mxu0 0.0
  %973 = vmatprep.subr.mxu0 0.0
  %974 = vmatpush1.msra.mxu0 %v60
  %975 = vmatprep.subr.mxu0 0.0
  %976 = vmatpush1.msra.mxu0 %v59
  %977 = vmatprep.subr.mxu0 0.0
  %978 = vmatpush1.msra.mxu0 %v58
  %979 = vmatprep.subr.mxu0 0.0
  %980 = vmatpush1.msra.mxu0 %v57
  %981 = vmatprep.subr.mxu0 0.0
  %982 = vmatpush2.msra.mxu0 0.0
  %983 = vmatprep.subr.mxu0 0.0
  %984 = vmatpush2.msra.mxu0 0.0
  %985 = vmatprep.subr.mxu0 0.0
  %986 = vmatpush2.msra.mxu0 0.0
  %987 = vmatprep.subr.mxu0 0.0
  %988 = vmatpush2.msra.mxu0 0.0
  %989 = vmatprep.subr.mxu0 0.0
  %990 = vmatpush2.msra.mxu0 0.0
  %991 = vmatprep.subr.mxu0 0.0
  %992 = vmatpush2.msra.mxu0 0.0
  %993 = vmatprep.subr.mxu0 0.0
  %994 = vmatpush2.msra.mxu0 0.0
  %995 = vmatprep.subr.mxu0 0.0
  %996 = vmatpush2.msra.mxu0 0.0
  %997 = vmatprep.subr.mxu0 0.0
  %998 = vmatpush2.msra.mxu0 0.0
  %999 = vmatprep.subr.mxu0 0.0
  %1000 = vmatpush2.msra.mxu0 0.0
  %1001 = vmatprep.subr.mxu0 0.0
  %1002 = vmatpush2.msra.mxu0 0.0
  %1003 = vmatprep.subr.mxu0 0.0
  %1004 = vmatpush2.msra.mxu0 0.0
  %1005 = vmatprep.subr.mxu0 0.0
  %1006 = vmatpush2.msra.mxu0 0.0
  %1007 = vmatprep.subr.mxu0 0.0
  %1008 = vmatpush2.msra.mxu0 0.0
  %1009 = vmatprep.subr.mxu0 0.0
  %1010 = vmatpush2.msra.mxu0 0.0
  %1011 = vmatprep.subr.mxu0 0.0
  %1012 = vmatpush2.msra.mxu0 0.0
  %1013 = vmatprep.mubr.f32.mxu0 0.0
  %1014 = vmatmul.mubr.f32.gmra.mxu0 %v885
  %v1015 = vpop.f32.mrf.mxu0
  %v1016 = vadd.f32 %v788, %v1015
  %v1017 = vpop.f32.mrf.mxu0
  %1018 = vmatprep.mubr.f32.mxu0 0.0
  %1019 = vmatmul.mubr.f32.gmra.mxu0 %v887
  %v1020 = vpop.f32.mrf.mxu0
  %v1021 = vadd.f32 %v788, %v1020
  %v1022 = vpop.f32.mrf.mxu0
  %1023 = vmatprep.mubr.f32.mxu0 0.0
  %1024 = vmatmul.mubr.f32.gmra.mxu0 %v889
  %v1025 = vpop.f32.mrf.mxu0
  %v1026 = vadd.f32 %v788, %v1025
  %v1027 = vpop.f32.mrf.mxu0
  %1028 = vmatprep.mubr.f32.mxu0 0.0
  %1029 = vmatmul.mubr.f32.gmra.mxu0 %v891
  %v1030 = vpop.f32.mrf.mxu0
  %v1031 = vadd.f32 %v788, %v1030
  %v1032 = vpop.f32.mrf.mxu0
  %1033 = vmatprep.mubr.f32.mxu0 0.0
  %1034 = vmatmul.mubr.f32.gmra.mxu0 %v893
  %v1035 = vpop.f32.mrf.mxu0
  %v1036 = vadd.f32 %v788, %v1035
  %v1037 = vpop.f32.mrf.mxu0
  %1038 = vmatprep.mubr.f32.mxu0 0.0
  %1039 = vmatmul.mubr.f32.gmra.mxu0 %v895
  %v1040 = vpop.f32.mrf.mxu0
  %v1041 = vadd.f32 %v788, %v1040
  %v1042 = vpop.f32.mrf.mxu0
  %1043 = vmatprep.mubr.f32.mxu0 0.0
  %1044 = vmatmul.mubr.f32.gmra.mxu0 %v897
  %v1045 = vpop.f32.mrf.mxu0
  %v1046 = vadd.f32 %v788, %v1045
  %v1047 = vpop.f32.mrf.mxu0
  %1048 = vmatprep.mubr.f32.mxu0 0.0
  %1049 = vmatmul.mubr.f32.gmra.mxu0 %v899
  %v1050 = vpop.f32.mrf.mxu0
  %v1051 = vadd.f32 %v788, %v1050
  %v1052 = vpop.f32.mrf.mxu0
  %1053 = vmatprep.mubr.f32.mxu0 0.0
  %1054 = vmatmul.mubr.f32.gmra.mxu0 %v901
  %v1055 = vpop.f32.mrf.mxu0
  %v1056 = vadd.f32 %v788, %v1055
  %v1057 = vpop.f32.mrf.mxu0
  %1058 = vmatprep.mubr.f32.mxu0 0.0
  %1059 = vmatmul.mubr.f32.gmra.mxu0 %v903
  %v1060 = vpop.f32.mrf.mxu0
  %v1061 = vadd.f32 %v788, %v1060
  %v1062 = vpop.f32.mrf.mxu0
  %1063 = vmatprep.mubr.f32.mxu0 0.0
  %1064 = vmatmul.mubr.f32.gmra.mxu0 %v905
  %v1065 = vpop.f32.mrf.mxu0
  %v1066 = vadd.f32 %v788, %v1065
  %v1067 = vpop.f32.mrf.mxu0
  %1068 = vmatprep.mubr.f32.mxu0 0.0
  %1069 = vmatmul.mubr.f32.gmra.mxu0 %v907
  %v1070 = vpop.f32.mrf.mxu0
  %v1071 = vadd.f32 %v788, %v1070
  %v1072 = vpop.f32.mrf.mxu0
  %1073 = vmatprep.mubr.f32.mxu0 0.0
  %1074 = vmatmul.mubr.f32.gmra.mxu0 %v909
  %v1075 = vpop.f32.mrf.mxu0
  %v1076 = vadd.f32 %v788, %v1075
  %v1077 = vpop.f32.mrf.mxu0
  %1078 = vmatprep.mubr.f32.mxu0 0.0
  %1079 = vmatmul.mubr.f32.gmra.mxu0 %v911
  %v1080 = vpop.f32.mrf.mxu0
  %v1081 = vadd.f32 %v788, %v1080
  %v1082 = vpop.f32.mrf.mxu0
  %1083 = vmatprep.mubr.f32.mxu0 0.0
  %1084 = vmatmul.mubr.f32.gmra.mxu0 %v913
  %v1085 = vpop.f32.mrf.mxu0
  %v1086 = vadd.f32 %v788, %v1085
  %v1087 = vpop.f32.mrf.mxu0
  %1088 = vmatprep.mubr.f32.mxu0 0.0
  %1089 = vmatmul.mubr.f32.gmra.mxu0 %v915
  %v1090 = vpop.f32.mrf.mxu0
  %v1091 = vadd.f32 %v788, %v1090
  %v1092 = vpop.f32.mrf.mxu0
  %1093 = vmatprep.mubr.f32.mxu0 0.0
  %1094 = vmatmul.mubr.f32.gmra.mxu0 %v917
  %v1095 = vpop.f32.mrf.mxu0
  %v1096 = vadd.f32 %v788, %v1095
  %v1097 = vpop.f32.mrf.mxu0
  %1098 = vmatprep.mubr.f32.mxu0 0.0
  %1099 = vmatmul.mubr.f32.gmra.mxu0 %v919
  %v1100 = vpop.f32.mrf.mxu0
  %v1101 = vadd.f32 %v788, %v1100
  %v1102 = vpop.f32.mrf.mxu0
  %1103 = vmatprep.mubr.f32.mxu0 0.0
  %1104 = vmatmul.mubr.f32.gmra.mxu0 %v921
  %v1105 = vpop.f32.mrf.mxu0
  %v1106 = vadd.f32 %v788, %v1105
  %v1107 = vpop.f32.mrf.mxu0
  %1108 = vmatprep.mubr.f32.mxu0 0.0
  %1109 = vmatmul.mubr.f32.gmra.mxu0 %v923
  %v1110 = vpop.f32.mrf.mxu0
  %v1111 = vadd.f32 %v788, %v1110
  %v1112 = vpop.f32.mrf.mxu0
  %1113 = vmatprep.mubr.f32.mxu0 0.0
  %1114 = vmatmul.mubr.f32.gmra.mxu0 %v925
  %v1115 = vpop.f32.mrf.mxu0
  %v1116 = vadd.f32 %v788, %v1115
  %v1117 = vpop.f32.mrf.mxu0
  %1118 = vmatprep.mubr.f32.mxu0 0.0
  %1119 = vmatmul.mubr.f32.gmra.mxu0 %v927
  %v1120 = vpop.f32.mrf.mxu0
  %v1121 = vadd.f32 %v788, %v1120
  %v1122 = vpop.f32.mrf.mxu0
  %1123 = vmatprep.mubr.f32.mxu0 0.0
  %1124 = vmatmul.mubr.f32.gmra.mxu0 %v929
  %v1125 = vpop.f32.mrf.mxu0
  %v1126 = vadd.f32 %v788, %v1125
  %v1127 = vpop.f32.mrf.mxu0
  %1128 = vmatprep.mubr.f32.mxu0 0.0
  %1129 = vmatmul.mubr.f32.gmra.mxu0 %v931
  %v1130 = vpop.f32.mrf.mxu0
  %v1131 = vadd.f32 %v788, %v1130
  %v1132 = vpop.f32.mrf.mxu0
  %1133 = vmatprep.mubr.f32.mxu0 0.0
  %1134 = vmatmul.mubr.f32.gmra.mxu0 %v933
  %v1135 = vpop.f32.mrf.mxu0
  %v1136 = vadd.f32 %v788, %v1135
  %v1137 = vpop.f32.mrf.mxu0
  %1138 = vmatprep.mubr.f32.mxu0 0.0
  %1139 = vmatmul.mubr.f32.gmra.mxu0 %v935
  %v1140 = vpop.f32.mrf.mxu0
  %v1141 = vadd.f32 %v788, %v1140
  %v1142 = vpop.f32.mrf.mxu0
  %1143 = vmatprep.mubr.f32.mxu0 0.0
  %1144 = vmatmul.mubr.f32.gmra.mxu0 %v937
  %v1145 = vpop.f32.mrf.mxu0
  %v1146 = vadd.f32 %v788, %v1145
  %v1147 = vpop.f32.mrf.mxu0
  %1148 = vmatprep.mubr.f32.mxu0 0.0
  %1149 = vmatmul.mubr.f32.gmra.mxu0 %v939
  %v1150 = vpop.f32.mrf.mxu0
  %v1151 = vadd.f32 %v788, %v1150
  %v1152 = vpop.f32.mrf.mxu0
  %1153 = vmatprep.mubr.f32.mxu0 0.0
  %1154 = vmatmul.mubr.f32.gmra.mxu0 %v941
  %v1155 = vpop.f32.mrf.mxu0
  %v1156 = vadd.f32 %v788, %v1155
  %v1157 = vpop.f32.mrf.mxu0
  %1158 = vmatprep.mubr.f32.mxu0 0.0
  %1159 = vmatmul.mubr.f32.gmra.mxu0 %v943
  %v1160 = vpop.f32.mrf.mxu0
  %v1161 = vadd.f32 %v788, %v1160
  %v1162 = vpop.f32.mrf.mxu0
  %1163 = vmatprep.mubr.f32.mxu0 0.0
  %1164 = vmatmul.mubr.f32.gmra.mxu0 %v945
  %v1165 = vpop.f32.mrf.mxu0
  %v1166 = vadd.f32 %v788, %v1165
  %v1167 = vpop.f32.mrf.mxu0
  %1168 = vmatprep.mubr.f32.mxu0 0.0
  %1169 = vmatmul.mubr.f32.gmra.mxu0 %v947
  %v1170 = vpop.f32.mrf.mxu0
  %v1171 = vadd.f32 %v788, %v1170
  %v1172 = vpop.f32.mrf.mxu0
  %1173 = vdwg.mxu0
  %v1174 = vsub.f32 %v595, %v1016
  %v1175 = vsub.f32 %v600, %v1021
  %v1176 = vsub.f32 %v605, %v1026
  %v1177 = vsub.f32 %v610, %v1031
  %v1178 = vsub.f32 %v615, %v1036
  %v1179 = vsub.f32 %v620, %v1041
  %v1180 = vsub.f32 %v625, %v1046
  %v1181 = vsub.f32 %v630, %v1051
  %v1182 = vsub.f32 %v635, %v1056
  %v1183 = vsub.f32 %v640, %v1061
  %v1184 = vsub.f32 %v645, %v1066
  %v1185 = vsub.f32 %v650, %v1071
  %v1186 = vsub.f32 %v655, %v1076
  %v1187 = vsub.f32 %v660, %v1081
  %v1188 = vsub.f32 %v665, %v1086
  %v1189 = vsub.f32 %v670, %v1091
  %v1190 = vsub.f32 %v675, %v1096
  %v1191 = vsub.f32 %v680, %v1101
  %v1192 = vsub.f32 %v685, %v1106
  %v1193 = vsub.f32 %v690, %v1111
  %v1194 = vsub.f32 %v695, %v1116
  %v1195 = vsub.f32 %v700, %v1121
  %v1196 = vsub.f32 %v705, %v1126
  %v1197 = vsub.f32 %v710, %v1131
  %v1198 = vsub.f32 %v715, %v1136
  %v1199 = vsub.f32 %v720, %v1141
  %v1200 = vsub.f32 %v725, %v1146
  %v1201 = vsub.f32 %v730, %v1151
  %v1202 = vsub.f32 %v735, %v1156
  %v1203 = vsub.f32 %v740, %v1161
  %v1204 = vsub.f32 %v745, %v1166
  %v1205 = vsub.f32 %v750, %v1171
  %v1206 = vsub.f32 0.0, %v1016
  %v1207 = vsub.f32 0.0, %v1021
  %v1208 = vsub.f32 0.0, %v1026
  %v1209 = vsub.f32 0.0, %v1031
  %v1210 = vsub.f32 0.0, %v1036
  %v1211 = vsub.f32 0.0, %v1041
  %v1212 = vsub.f32 0.0, %v1046
  %v1213 = vsub.f32 0.0, %v1051
  %v1214 = vsub.f32 0.0, %v1056
  %v1215 = vsub.f32 0.0, %v1061
  %v1216 = vsub.f32 0.0, %v1066
  %v1217 = vsub.f32 0.0, %v1071
  %v1218 = vsub.f32 0.0, %v1076
  %v1219 = vsub.f32 0.0, %v1081
  %v1220 = vsub.f32 0.0, %v1086
  %v1221 = vsub.f32 0.0, %v1091
  %v1222 = vsub.f32 0.0, %v1096
  %v1223 = vsub.f32 0.0, %v1101
  %v1224 = vsub.f32 0.0, %v1106
  %v1225 = vsub.f32 0.0, %v1111
  %v1226 = vsub.f32 0.0, %v1116
  %v1227 = vsub.f32 0.0, %v1121
  %v1228 = vsub.f32 0.0, %v1126
  %v1229 = vsub.f32 0.0, %v1131
  %v1230 = vsub.f32 0.0, %v1136
  %v1231 = vsub.f32 0.0, %v1141
  %v1232 = vsub.f32 0.0, %v1146
  %v1233 = vsub.f32 0.0, %v1151
  %v1234 = vsub.f32 0.0, %v1156
  %v1235 = vsub.f32 0.0, %v1161
  %v1236 = vsub.f32 0.0, %v1166
  %v1237 = vsub.f32 0.0, %v1171
  %v1238 = vmul.f32 %v1206, 1.442695
  %v1239 = vpow.pop %v1238
  %v1240 = vmul.f32 %v1207, 1.442695
  %v1241 = vpow.pop %v1240
  %v1242 = vmul.f32 %v1208, 1.442695
  %v1243 = vpow.pop %v1242
  %v1244 = vmul.f32 %v1209, 1.442695
  %v1245 = vpow.pop %v1244
  %v1246 = vmul.f32 %v1210, 1.442695
  %v1247 = vpow.pop %v1246
  %v1248 = vmul.f32 %v1211, 1.442695
  %v1249 = vpow.pop %v1248
  %v1250 = vmul.f32 %v1212, 1.442695
  %v1251 = vpow.pop %v1250
  %v1252 = vmul.f32 %v1213, 1.442695
  %v1253 = vpow.pop %v1252
  %v1254 = vmul.f32 %v1214, 1.442695
  %v1255 = vpow.pop %v1254
  %v1256 = vmul.f32 %v1215, 1.442695
  %v1257 = vpow.pop %v1256
  %v1258 = vmul.f32 %v1216, 1.442695
  %v1259 = vpow.pop %v1258
  %v1260 = vmul.f32 %v1217, 1.442695
  %v1261 = vpow.pop %v1260
  %v1262 = vmul.f32 %v1218, 1.442695
  %v1263 = vpow.pop %v1262
  %v1264 = vmul.f32 %v1219, 1.442695
  %v1265 = vpow.pop %v1264
  %v1266 = vmul.f32 %v1220, 1.442695
  %v1267 = vpow.pop %v1266
  %v1268 = vmul.f32 %v1221, 1.442695
  %v1269 = vpow.pop %v1268
  %v1270 = vmul.f32 %v1222, 1.442695
  %v1271 = vpow.pop %v1270
  %v1272 = vmul.f32 %v1223, 1.442695
  %v1273 = vpow.pop %v1272
  %v1274 = vmul.f32 %v1224, 1.442695
  %v1275 = vpow.pop %v1274
  %v1276 = vmul.f32 %v1225, 1.442695
  %v1277 = vpow.pop %v1276
  %v1278 = vmul.f32 %v1226, 1.442695
  %v1279 = vpow.pop %v1278
  %v1280 = vmul.f32 %v1227, 1.442695
  %v1281 = vpow.pop %v1280
  %v1282 = vmul.f32 %v1228, 1.442695
  %v1283 = vpow.pop %v1282
  %v1284 = vmul.f32 %v1229, 1.442695
  %v1285 = vpow.pop %v1284
  %v1286 = vmul.f32 %v1230, 1.442695
  %v1287 = vpow.pop %v1286
  %v1288 = vmul.f32 %v1231, 1.442695
  %v1289 = vpow.pop %v1288
  %v1290 = vmul.f32 %v1232, 1.442695
  %v1291 = vpow.pop %v1290
  %v1292 = vmul.f32 %v1233, 1.442695
  %v1293 = vpow.pop %v1292
  %v1294 = vmul.f32 %v1234, 1.442695
  %v1295 = vpow.pop %v1294
  %v1296 = vmul.f32 %v1235, 1.442695
  %v1297 = vpow.pop %v1296
  %v1298 = vmul.f32 %v1236, 1.442695
  %v1299 = vpow.pop %v1298
  %v1300 = vmul.f32 %v1237, 1.442695
  %v1301 = vpow.pop %v1300
  %1334 = vrot.lane.b32.xlu0 %v1239, 120
  %v1335 = vpop.permute.xlu0 %1334
  %1336 = vrot.lane.b32.xlu0 %v1241, 120
  %v1337 = vpop.permute.xlu0 %1336
  %1338 = vrot.lane.b32.xlu0 %v1243, 120
  %v1339 = vpop.permute.xlu0 %1338
  %1340 = vrot.lane.b32.xlu0 %v1245, 120
  %v1341 = vpop.permute.xlu0 %1340
  %1342 = vrot.lane.b32.xlu0 %v1247, 120
  %v1343 = vpop.permute.xlu0 %1342
  %1344 = vrot.lane.b32.xlu0 %v1249, 120
  %v1345 = vpop.permute.xlu0 %1344
  %1346 = vrot.lane.b32.xlu0 %v1251, 120
  %v1347 = vpop.permute.xlu0 %1346
  %1348 = vrot.lane.b32.xlu0 %v1253, 120
  %v1349 = vpop.permute.xlu0 %1348
  %1350 = vrot.lane.b32.xlu0 %v1255, 120
  %v1351 = vpop.permute.xlu0 %1350
  %1352 = vrot.lane.b32.xlu0 %v1257, 120
  %v1353 = vpop.permute.xlu0 %1352
  %1354 = vrot.lane.b32.xlu0 %v1259, 120
  %v1355 = vpop.permute.xlu0 %1354
  %1356 = vrot.lane.b32.xlu0 %v1261, 120
  %v1357 = vpop.permute.xlu0 %1356
  %1358 = vrot.lane.b32.xlu0 %v1263, 120
  %v1359 = vpop.permute.xlu0 %1358
  %1360 = vrot.lane.b32.xlu0 %v1265, 120
  %v1361 = vpop.permute.xlu0 %1360
  %1362 = vrot.lane.b32.xlu0 %v1267, 120
  %v1363 = vpop.permute.xlu0 %1362
  %1364 = vrot.lane.b32.xlu0 %v1269, 120
  %v1365 = vpop.permute.xlu0 %1364
  %1366 = vrot.lane.b32.xlu0 %v1271, 120
  %v1367 = vpop.permute.xlu0 %1366
  %1368 = vrot.lane.b32.xlu0 %v1273, 120
  %v1369 = vpop.permute.xlu0 %1368
  %1370 = vrot.lane.b32.xlu0 %v1275, 120
  %v1371 = vpop.permute.xlu0 %1370
  %1372 = vrot.lane.b32.xlu0 %v1277, 120
  %v1373 = vpop.permute.xlu0 %1372
  %1374 = vrot.lane.b32.xlu0 %v1279, 120
  %v1375 = vpop.permute.xlu0 %1374
  %1376 = vrot.lane.b32.xlu0 %v1281, 120
  %v1377 = vpop.permute.xlu0 %1376
  %1378 = vrot.lane.b32.xlu0 %v1283, 120
  %v1379 = vpop.permute.xlu0 %1378
  %1380 = vrot.lane.b32.xlu0 %v1285, 120
  %v1381 = vpop.permute.xlu0 %1380
  %1382 = vrot.lane.b32.xlu0 %v1287, 120
  %v1383 = vpop.permute.xlu0 %1382
  %1384 = vrot.lane.b32.xlu0 %v1289, 120
  %v1385 = vpop.permute.xlu0 %1384
  %1386 = vrot.lane.b32.xlu0 %v1291, 120
  %v1387 = vpop.permute.xlu0 %1386
  %1388 = vrot.lane.b32.xlu0 %v1293, 120
  %v1389 = vpop.permute.xlu0 %1388
  %1390 = vrot.lane.b32.xlu0 %v1295, 120
  %v1391 = vpop.permute.xlu0 %1390
  %1392 = vrot.lane.b32.xlu0 %v1297, 120
  %v1393 = vpop.permute.xlu0 %1392
  %1394 = vrot.lane.b32.xlu0 %v1299, 120
  %v1395 = vpop.permute.xlu0 %1394
  %1396 = vrot.lane.b32.xlu0 %v1301, 120
  %v1397 = vpop.permute.xlu0 %1396
  %v1430 = vmul.f32 %v1174, %v1335
  %v1431 = vmul.f32 %v1175, %v1337
  %v1432 = vmul.f32 %v1176, %v1339
  %v1433 = vmul.f32 %v1177, %v1341
  %v1434 = vmul.f32 %v1178, %v1343
  %v1435 = vmul.f32 %v1179, %v1345
  %v1436 = vmul.f32 %v1180, %v1347
  %v1437 = vmul.f32 %v1181, %v1349
  %v1438 = vmul.f32 %v1182, %v1351
  %v1439 = vmul.f32 %v1183, %v1353
  %v1440 = vmul.f32 %v1184, %v1355
  %v1441 = vmul.f32 %v1185, %v1357
  %v1442 = vmul.f32 %v1186, %v1359
  %v1443 = vmul.f32 %v1187, %v1361
  %v1444 = vmul.f32 %v1188, %v1363
  %v1445 = vmul.f32 %v1189, %v1365
  %v1446 = vmul.f32 %v1190, %v1367
  %v1447 = vmul.f32 %v1191, %v1369
  %v1448 = vmul.f32 %v1192, %v1371
  %v1449 = vmul.f32 %v1193, %v1373
  %v1450 = vmul.f32 %v1194, %v1375
  %v1451 = vmul.f32 %v1195, %v1377
  %v1452 = vmul.f32 %v1196, %v1379
  %v1453 = vmul.f32 %v1197, %v1381
  %v1454 = vmul.f32 %v1198, %v1383
  %v1455 = vmul.f32 %v1199, %v1385
  %v1456 = vmul.f32 %v1200, %v1387
  %v1457 = vmul.f32 %v1201, %v1389
  %v1458 = vmul.f32 %v1202, %v1391
  %v1459 = vmul.f32 %v1203, %v1393
  %v1460 = vmul.f32 %v1204, %v1395
  %v1461 = vmul.f32 %v1205, %v1397
  %v1462 = vlaneseq
  %v1463 = vshrl.u32 %v1462, 7
  %v1464 = vsub.s32 0, %v1463
  %v1465 = vrot.slane %v63, %v1464
  %vm1466 = vcmask 64512
  %v1468 = vsel %vm1466, %v1430, 0
  %v1471 = vsel %vm1466, %v1431, 0
  %v1474 = vsel %vm1466, %v1432, 0
  %v1477 = vsel %vm1466, %v1433, 0
  %v1480 = vsel %vm1466, %v1434, 0
  %v1483 = vsel %vm1466, %v1435, 0
  %v1486 = vsel %vm1466, %v1436, 0
  %v1489 = vsel %vm1466, %v1437, 0
  %v1492 = vsel %vm1466, %v1438, 0
  %v1495 = vsel %vm1466, %v1439, 0
  %v1498 = vsel %vm1466, %v1440, 0
  %v1501 = vsel %vm1466, %v1441, 0
  %v1504 = vsel %vm1466, %v1442, 0
  %v1507 = vsel %vm1466, %v1443, 0
  %v1510 = vsel %vm1466, %v1444, 0
  %v1513 = vsel %vm1466, %v1445, 0
  %v1516 = vsel %vm1466, %v1446, 0
  %v1519 = vsel %vm1466, %v1447, 0
  %v1522 = vsel %vm1466, %v1448, 0
  %v1525 = vsel %vm1466, %v1449, 0
  %v1528 = vsel %vm1466, %v1450, 0
  %v1531 = vsel %vm1466, %v1451, 0
  %v1534 = vsel %vm1466, %v1452, 0
  %v1537 = vsel %vm1466, %v1453, 0
  %v1540 = vsel %vm1466, %v1454, 0
  %v1543 = vsel %vm1466, %v1455, 0
  %v1546 = vsel %vm1466, %v1456, 0
  %v1549 = vsel %vm1466, %v1457, 0
  %v1552 = vsel %vm1466, %v1458, 0
  %v1555 = vsel %vm1466, %v1459, 0
  %v1558 = vsel %vm1466, %v1460, 0
  %v1561 = vsel %vm1466, %v1461, 0
  %1563 = vmatprep.subr.mxu0 0.0
  %1564 = vmatpush1.msra.mxu0 0.0
  %1565 = vmatprep.subr.mxu0 0.0
  %1566 = vmatpush1.msra.mxu0 0.0
  %1567 = vmatprep.subr.mxu0 0.0
  %1568 = vmatpush1.msra.mxu0 0.0
  %1569 = vmatprep.subr.mxu0 0.0
  %1570 = vmatpush1.msra.mxu0 0.0
  %1571 = vmatprep.subr.mxu0 0.0
  %1572 = vmatpush1.msra.mxu0 0.0
  %1573 = vmatprep.subr.mxu0 0.0
  %1574 = vmatpush1.msra.mxu0 0.0
  %1575 = vmatprep.subr.mxu0 0.0
  %1576 = vmatpush1.msra.mxu0 0.0
  %1577 = vmatprep.subr.mxu0 0.0
  %1578 = vmatpush1.msra.mxu0 0.0
  %1579 = vmatprep.subr.mxu0 0.0
  %1580 = vmatpush1.msra.mxu0 0.0
  %1581 = vmatprep.subr.mxu0 0.0
  %1582 = vmatpush1.msra.mxu0 0.0
  %1583 = vmatprep.subr.mxu0 0.0
  %1584 = vmatpush1.msra.mxu0 0.0
  %1585 = vmatprep.subr.mxu0 0.0
  %1586 = vmatpush1.msra.mxu0 0.0
  %1587 = vmatprep.subr.mxu0 0.0
  %1588 = vmatpush1.msra.mxu0 0.0
  %1589 = vmatprep.subr.mxu0 0.0
  %1590 = vmatpush1.msra.mxu0 0.0
  %1591 = vmatprep.subr.mxu0 0.0
  %1592 = vmatpush1.msra.mxu0 0.0
  %1593 = vmatprep.subr.mxu0 0.0
  %1594 = vmatpush1.msra.mxu0 %v62
  %1595 = vmatprep.subr.mxu0 0.0
  %1596 = vmatpush2.msra.mxu0 0.0
  %1597 = vmatprep.subr.mxu0 0.0
  %1598 = vmatpush2.msra.mxu0 0.0
  %1599 = vmatprep.subr.mxu0 0.0
  %1600 = vmatpush2.msra.mxu0 0.0
  %1601 = vmatprep.subr.mxu0 0.0
  %1602 = vmatpush2.msra.mxu0 0.0
  %1603 = vmatprep.subr.mxu0 0.0
  %1604 = vmatpush2.msra.mxu0 0.0
  %1605 = vmatprep.subr.mxu0 0.0
  %1606 = vmatpush2.msra.mxu0 0.0
  %1607 = vmatprep.subr.mxu0 0.0
  %1608 = vmatpush2.msra.mxu0 0.0
  %1609 = vmatprep.subr.mxu0 0.0
  %1610 = vmatpush2.msra.mxu0 0.0
  %1611 = vmatprep.subr.mxu0 0.0
  %1612 = vmatpush2.msra.mxu0 0.0
  %1613 = vmatprep.subr.mxu0 0.0
  %1614 = vmatpush2.msra.mxu0 0.0
  %1615 = vmatprep.subr.mxu0 0.0
  %1616 = vmatpush2.msra.mxu0 0.0
  %1617 = vmatprep.subr.mxu0 0.0
  %1618 = vmatpush2.msra.mxu0 0.0
  %1619 = vmatprep.subr.mxu0 0.0
  %1620 = vmatpush2.msra.mxu0 0.0
  %1621 = vmatprep.subr.mxu0 0.0
  %1622 = vmatpush2.msra.mxu0 0.0
  %1623 = vmatprep.subr.mxu0 0.0
  %1624 = vmatpush2.msra.mxu0 0.0
  %1625 = vmatprep.subr.mxu0 0.0
  %1626 = vmatpush2.msra.mxu0 0.0
  %1627 = vmatprep.mubr.f32.mxu0 0.0
  %1628 = vmatmul.mubr.f32.gmra.mxu0 %v1468
  %v1629 = vpop.f32.mrf.mxu0
  %v1630 = vadd.f32 %v1465, %v1629
  %v1631 = vpop.f32.mrf.mxu0
  %1632 = vmatprep.mubr.f32.mxu0 0.0
  %1633 = vmatmul.mubr.f32.gmra.mxu0 %v1471
  %v1634 = vpop.f32.mrf.mxu0
  %v1635 = vadd.f32 %v1465, %v1634
  %v1636 = vpop.f32.mrf.mxu0
  %1637 = vmatprep.mubr.f32.mxu0 0.0
  %1638 = vmatmul.mubr.f32.gmra.mxu0 %v1474
  %v1639 = vpop.f32.mrf.mxu0
  %v1640 = vadd.f32 %v1465, %v1639
  %v1641 = vpop.f32.mrf.mxu0
  %1642 = vmatprep.mubr.f32.mxu0 0.0
  %1643 = vmatmul.mubr.f32.gmra.mxu0 %v1477
  %v1644 = vpop.f32.mrf.mxu0
  %v1645 = vadd.f32 %v1465, %v1644
  %v1646 = vpop.f32.mrf.mxu0
  %1647 = vmatprep.mubr.f32.mxu0 0.0
  %1648 = vmatmul.mubr.f32.gmra.mxu0 %v1480
  %v1649 = vpop.f32.mrf.mxu0
  %v1650 = vadd.f32 %v1465, %v1649
  %v1651 = vpop.f32.mrf.mxu0
  %1652 = vmatprep.mubr.f32.mxu0 0.0
  %1653 = vmatmul.mubr.f32.gmra.mxu0 %v1483
  %v1654 = vpop.f32.mrf.mxu0
  %v1655 = vadd.f32 %v1465, %v1654
  %v1656 = vpop.f32.mrf.mxu0
  %1657 = vmatprep.mubr.f32.mxu0 0.0
  %1658 = vmatmul.mubr.f32.gmra.mxu0 %v1486
  %v1659 = vpop.f32.mrf.mxu0
  %v1660 = vadd.f32 %v1465, %v1659
  %v1661 = vpop.f32.mrf.mxu0
  %1662 = vmatprep.mubr.f32.mxu0 0.0
  %1663 = vmatmul.mubr.f32.gmra.mxu0 %v1489
  %v1664 = vpop.f32.mrf.mxu0
  %v1665 = vadd.f32 %v1465, %v1664
  %v1666 = vpop.f32.mrf.mxu0
  %1667 = vmatprep.mubr.f32.mxu0 0.0
  %1668 = vmatmul.mubr.f32.gmra.mxu0 %v1492
  %v1669 = vpop.f32.mrf.mxu0
  %v1670 = vadd.f32 %v1465, %v1669
  %v1671 = vpop.f32.mrf.mxu0
  %1672 = vmatprep.mubr.f32.mxu0 0.0
  %1673 = vmatmul.mubr.f32.gmra.mxu0 %v1495
  %v1674 = vpop.f32.mrf.mxu0
  %v1675 = vadd.f32 %v1465, %v1674
  %v1676 = vpop.f32.mrf.mxu0
  %1677 = vmatprep.mubr.f32.mxu0 0.0
  %1678 = vmatmul.mubr.f32.gmra.mxu0 %v1498
  %v1679 = vpop.f32.mrf.mxu0
  %v1680 = vadd.f32 %v1465, %v1679
  %v1681 = vpop.f32.mrf.mxu0
  %1682 = vmatprep.mubr.f32.mxu0 0.0
  %1683 = vmatmul.mubr.f32.gmra.mxu0 %v1501
  %v1684 = vpop.f32.mrf.mxu0
  %v1685 = vadd.f32 %v1465, %v1684
  %v1686 = vpop.f32.mrf.mxu0
  %1687 = vmatprep.mubr.f32.mxu0 0.0
  %1688 = vmatmul.mubr.f32.gmra.mxu0 %v1504
  %v1689 = vpop.f32.mrf.mxu0
  %v1690 = vadd.f32 %v1465, %v1689
  %v1691 = vpop.f32.mrf.mxu0
  %1692 = vmatprep.mubr.f32.mxu0 0.0
  %1693 = vmatmul.mubr.f32.gmra.mxu0 %v1507
  %v1694 = vpop.f32.mrf.mxu0
  %v1695 = vadd.f32 %v1465, %v1694
  %v1696 = vpop.f32.mrf.mxu0
  %1697 = vmatprep.mubr.f32.mxu0 0.0
  %1698 = vmatmul.mubr.f32.gmra.mxu0 %v1510
  %v1699 = vpop.f32.mrf.mxu0
  %v1700 = vadd.f32 %v1465, %v1699
  %v1701 = vpop.f32.mrf.mxu0
  %1702 = vmatprep.mubr.f32.mxu0 0.0
  %1703 = vmatmul.mubr.f32.gmra.mxu0 %v1513
  %v1704 = vpop.f32.mrf.mxu0
  %v1705 = vadd.f32 %v1465, %v1704
  %v1706 = vpop.f32.mrf.mxu0
  %1707 = vmatprep.mubr.f32.mxu0 0.0
  %1708 = vmatmul.mubr.f32.gmra.mxu0 %v1516
  %v1709 = vpop.f32.mrf.mxu0
  %v1710 = vadd.f32 %v1465, %v1709
  %v1711 = vpop.f32.mrf.mxu0
  %1712 = vmatprep.mubr.f32.mxu0 0.0
  %1713 = vmatmul.mubr.f32.gmra.mxu0 %v1519
  %v1714 = vpop.f32.mrf.mxu0
  %v1715 = vadd.f32 %v1465, %v1714
  %v1716 = vpop.f32.mrf.mxu0
  %1717 = vmatprep.mubr.f32.mxu0 0.0
  %1718 = vmatmul.mubr.f32.gmra.mxu0 %v1522
  %v1719 = vpop.f32.mrf.mxu0
  %v1720 = vadd.f32 %v1465, %v1719
  %v1721 = vpop.f32.mrf.mxu0
  %1722 = vmatprep.mubr.f32.mxu0 0.0
  %1723 = vmatmul.mubr.f32.gmra.mxu0 %v1525
  %v1724 = vpop.f32.mrf.mxu0
  %v1725 = vadd.f32 %v1465, %v1724
  %v1726 = vpop.f32.mrf.mxu0
  %1727 = vmatprep.mubr.f32.mxu0 0.0
  %1728 = vmatmul.mubr.f32.gmra.mxu0 %v1528
  %v1729 = vpop.f32.mrf.mxu0
  %v1730 = vadd.f32 %v1465, %v1729
  %v1731 = vpop.f32.mrf.mxu0
  %1732 = vmatprep.mubr.f32.mxu0 0.0
  %1733 = vmatmul.mubr.f32.gmra.mxu0 %v1531
  %v1734 = vpop.f32.mrf.mxu0
  %v1735 = vadd.f32 %v1465, %v1734
  %v1736 = vpop.f32.mrf.mxu0
  %1737 = vmatprep.mubr.f32.mxu0 0.0
  %1738 = vmatmul.mubr.f32.gmra.mxu0 %v1534
  %v1739 = vpop.f32.mrf.mxu0
  %v1740 = vadd.f32 %v1465, %v1739
  %v1741 = vpop.f32.mrf.mxu0
  %1742 = vmatprep.mubr.f32.mxu0 0.0
  %1743 = vmatmul.mubr.f32.gmra.mxu0 %v1537
  %v1744 = vpop.f32.mrf.mxu0
  %v1745 = vadd.f32 %v1465, %v1744
  %v1746 = vpop.f32.mrf.mxu0
  %1747 = vmatprep.mubr.f32.mxu0 0.0
  %1748 = vmatmul.mubr.f32.gmra.mxu0 %v1540
  %v1749 = vpop.f32.mrf.mxu0
  %v1750 = vadd.f32 %v1465, %v1749
  %v1751 = vpop.f32.mrf.mxu0
  %1752 = vmatprep.mubr.f32.mxu0 0.0
  %1753 = vmatmul.mubr.f32.gmra.mxu0 %v1543
  %v1754 = vpop.f32.mrf.mxu0
  %v1755 = vadd.f32 %v1465, %v1754
  %v1756 = vpop.f32.mrf.mxu0
  %1757 = vmatprep.mubr.f32.mxu0 0.0
  %1758 = vmatmul.mubr.f32.gmra.mxu0 %v1546
  %v1759 = vpop.f32.mrf.mxu0
  %v1760 = vadd.f32 %v1465, %v1759
  %v1761 = vpop.f32.mrf.mxu0
  %1762 = vmatprep.mubr.f32.mxu0 0.0
  %1763 = vmatmul.mubr.f32.gmra.mxu0 %v1549
  %v1764 = vpop.f32.mrf.mxu0
  %v1765 = vadd.f32 %v1465, %v1764
  %v1766 = vpop.f32.mrf.mxu0
  %1767 = vmatprep.mubr.f32.mxu0 0.0
  %1768 = vmatmul.mubr.f32.gmra.mxu0 %v1552
  %v1769 = vpop.f32.mrf.mxu0
  %v1770 = vadd.f32 %v1465, %v1769
  %v1771 = vpop.f32.mrf.mxu0
  %1772 = vmatprep.mubr.f32.mxu0 0.0
  %1773 = vmatmul.mubr.f32.gmra.mxu0 %v1555
  %v1774 = vpop.f32.mrf.mxu0
  %v1775 = vadd.f32 %v1465, %v1774
  %v1776 = vpop.f32.mrf.mxu0
  %1777 = vmatprep.mubr.f32.mxu0 0.0
  %1778 = vmatmul.mubr.f32.gmra.mxu0 %v1558
  %v1779 = vpop.f32.mrf.mxu0
  %v1780 = vadd.f32 %v1465, %v1779
  %v1781 = vpop.f32.mrf.mxu0
  %1782 = vmatprep.mubr.f32.mxu0 0.0
  %1783 = vmatmul.mubr.f32.gmra.mxu0 %v1561
  %v1784 = vpop.f32.mrf.mxu0
  %v1785 = vadd.f32 %v1465, %v1784
  %v1786 = vpop.f32.mrf.mxu0
  %1787 = vdwg.mxu0
  %v1788 = vmax.f32 %v1630, 0.0
  %v1789 = vmax.f32 %v1635, 0.0
  %v1790 = vmax.f32 %v1640, 0.0
  %v1791 = vmax.f32 %v1645, 0.0
  %v1792 = vmax.f32 %v1650, 0.0
  %v1793 = vmax.f32 %v1655, 0.0
  %v1794 = vmax.f32 %v1660, 0.0
  %v1795 = vmax.f32 %v1665, 0.0
  %v1796 = vmax.f32 %v1670, 0.0
  %v1797 = vmax.f32 %v1675, 0.0
  %v1798 = vmax.f32 %v1680, 0.0
  %v1799 = vmax.f32 %v1685, 0.0
  %v1800 = vmax.f32 %v1690, 0.0
  %v1801 = vmax.f32 %v1695, 0.0
  %v1802 = vmax.f32 %v1700, 0.0
  %v1803 = vmax.f32 %v1705, 0.0
  %v1804 = vmax.f32 %v1710, 0.0
  %v1805 = vmax.f32 %v1715, 0.0
  %v1806 = vmax.f32 %v1720, 0.0
  %v1807 = vmax.f32 %v1725, 0.0
  %v1808 = vmax.f32 %v1730, 0.0
  %v1809 = vmax.f32 %v1735, 0.0
  %v1810 = vmax.f32 %v1740, 0.0
  %v1811 = vmax.f32 %v1745, 0.0
  %v1812 = vmax.f32 %v1750, 0.0
  %v1813 = vmax.f32 %v1755, 0.0
  %v1814 = vmax.f32 %v1760, 0.0
  %v1815 = vmax.f32 %v1765, 0.0
  %v1816 = vmax.f32 %v1770, 0.0
  %v1817 = vmax.f32 %v1775, 0.0
  %v1818 = vmax.f32 %v1780, 0.0
  %v1819 = vmax.f32 %v1785, 0.0
  %v1820 = vlaneseq
  %v1821 = vshrl.u32 %v1820, 7
  %v1822 = vsub.s32 0, %v1821
  %v1823 = vrot.slane %v68, %v1822
  %v1825 = vsel %vm431, %v1788, 0
  %v1828 = vsel %vm431, %v1789, 0
  %v1831 = vsel %vm431, %v1790, 0
  %v1834 = vsel %vm431, %v1791, 0
  %v1837 = vsel %vm431, %v1792, 0
  %v1840 = vsel %vm431, %v1793, 0
  %v1843 = vsel %vm431, %v1794, 0
  %v1846 = vsel %vm431, %v1795, 0
  %v1849 = vsel %vm431, %v1796, 0
  %v1852 = vsel %vm431, %v1797, 0
  %v1855 = vsel %vm431, %v1798, 0
  %v1858 = vsel %vm431, %v1799, 0
  %v1861 = vsel %vm431, %v1800, 0
  %v1864 = vsel %vm431, %v1801, 0
  %v1867 = vsel %vm431, %v1802, 0
  %v1870 = vsel %vm431, %v1803, 0
  %v1873 = vsel %vm431, %v1804, 0
  %v1876 = vsel %vm431, %v1805, 0
  %v1879 = vsel %vm431, %v1806, 0
  %v1882 = vsel %vm431, %v1807, 0
  %v1885 = vsel %vm431, %v1808, 0
  %v1888 = vsel %vm431, %v1809, 0
  %v1891 = vsel %vm431, %v1810, 0
  %v1894 = vsel %vm431, %v1811, 0
  %v1897 = vsel %vm431, %v1812, 0
  %v1900 = vsel %vm431, %v1813, 0
  %v1903 = vsel %vm431, %v1814, 0
  %v1906 = vsel %vm431, %v1815, 0
  %v1909 = vsel %vm431, %v1816, 0
  %v1912 = vsel %vm431, %v1817, 0
  %v1915 = vsel %vm431, %v1818, 0
  %v1918 = vsel %vm431, %v1819, 0
  %1920 = vmatprep.subr.mxu0 0.0
  %1921 = vmatpush1.msra.mxu0 0.0
  %1922 = vmatprep.subr.mxu0 0.0
  %1923 = vmatpush1.msra.mxu0 0.0
  %1924 = vmatprep.subr.mxu0 0.0
  %1925 = vmatpush1.msra.mxu0 0.0
  %1926 = vmatprep.subr.mxu0 0.0
  %1927 = vmatpush1.msra.mxu0 0.0
  %1928 = vmatprep.subr.mxu0 0.0
  %1929 = vmatpush1.msra.mxu0 0.0
  %1930 = vmatprep.subr.mxu0 0.0
  %1931 = vmatpush1.msra.mxu0 0.0
  %1932 = vmatprep.subr.mxu0 0.0
  %1933 = vmatpush1.msra.mxu0 0.0
  %1934 = vmatprep.subr.mxu0 0.0
  %1935 = vmatpush1.msra.mxu0 0.0
  %1936 = vmatprep.subr.mxu0 0.0
  %1937 = vmatpush1.msra.mxu0 0.0
  %1938 = vmatprep.subr.mxu0 0.0
  %1939 = vmatpush1.msra.mxu0 0.0
  %1940 = vmatprep.subr.mxu0 0.0
  %1941 = vmatpush1.msra.mxu0 0.0
  %1942 = vmatprep.subr.mxu0 0.0
  %1943 = vmatpush1.msra.mxu0 0.0
  %1944 = vmatprep.subr.mxu0 0.0
  %1945 = vmatpush1.msra.mxu0 %v67
  %1946 = vmatprep.subr.mxu0 0.0
  %1947 = vmatpush1.msra.mxu0 %v66
  %1948 = vmatprep.subr.mxu0 0.0
  %1949 = vmatpush1.msra.mxu0 %v65
  %1950 = vmatprep.subr.mxu0 0.0
  %1951 = vmatpush1.msra.mxu0 %v64
  %1952 = vmatprep.subr.mxu0 0.0
  %1953 = vmatpush2.msra.mxu0 0.0
  %1954 = vmatprep.subr.mxu0 0.0
  %1955 = vmatpush2.msra.mxu0 0.0
  %1956 = vmatprep.subr.mxu0 0.0
  %1957 = vmatpush2.msra.mxu0 0.0
  %1958 = vmatprep.subr.mxu0 0.0
  %1959 = vmatpush2.msra.mxu0 0.0
  %1960 = vmatprep.subr.mxu0 0.0
  %1961 = vmatpush2.msra.mxu0 0.0
  %1962 = vmatprep.subr.mxu0 0.0
  %1963 = vmatpush2.msra.mxu0 0.0
  %1964 = vmatprep.subr.mxu0 0.0
  %1965 = vmatpush2.msra.mxu0 0.0
  %1966 = vmatprep.subr.mxu0 0.0
  %1967 = vmatpush2.msra.mxu0 0.0
  %1968 = vmatprep.subr.mxu0 0.0
  %1969 = vmatpush2.msra.mxu0 0.0
  %1970 = vmatprep.subr.mxu0 0.0
  %1971 = vmatpush2.msra.mxu0 0.0
  %1972 = vmatprep.subr.mxu0 0.0
  %1973 = vmatpush2.msra.mxu0 0.0
  %1974 = vmatprep.subr.mxu0 0.0
  %1975 = vmatpush2.msra.mxu0 0.0
  %1976 = vmatprep.subr.mxu0 0.0
  %1977 = vmatpush2.msra.mxu0 0.0
  %1978 = vmatprep.subr.mxu0 0.0
  %1979 = vmatpush2.msra.mxu0 0.0
  %1980 = vmatprep.subr.mxu0 0.0
  %1981 = vmatpush2.msra.mxu0 0.0
  %1982 = vmatprep.subr.mxu0 0.0
  %1983 = vmatpush2.msra.mxu0 0.0
  %1984 = vmatprep.mubr.f32.mxu0 0.0
  %1985 = vmatmul.mubr.f32.gmra.mxu0 %v1825
  %v1986 = vpop.f32.mrf.mxu0
  %v1987 = vadd.f32 %v1823, %v1986
  %v1988 = vpop.f32.mrf.mxu0
  %1989 = vmatprep.mubr.f32.mxu0 0.0
  %1990 = vmatmul.mubr.f32.gmra.mxu0 %v1828
  %v1991 = vpop.f32.mrf.mxu0
  %v1992 = vadd.f32 %v1823, %v1991
  %v1993 = vpop.f32.mrf.mxu0
  %1994 = vmatprep.mubr.f32.mxu0 0.0
  %1995 = vmatmul.mubr.f32.gmra.mxu0 %v1831
  %v1996 = vpop.f32.mrf.mxu0
  %v1997 = vadd.f32 %v1823, %v1996
  %v1998 = vpop.f32.mrf.mxu0
  %1999 = vmatprep.mubr.f32.mxu0 0.0
  %2000 = vmatmul.mubr.f32.gmra.mxu0 %v1834
  %v2001 = vpop.f32.mrf.mxu0
  %v2002 = vadd.f32 %v1823, %v2001
  %v2003 = vpop.f32.mrf.mxu0
  %2004 = vmatprep.mubr.f32.mxu0 0.0
  %2005 = vmatmul.mubr.f32.gmra.mxu0 %v1837
  %v2006 = vpop.f32.mrf.mxu0
  %v2007 = vadd.f32 %v1823, %v2006
  %v2008 = vpop.f32.mrf.mxu0
  %2009 = vmatprep.mubr.f32.mxu0 0.0
  %2010 = vmatmul.mubr.f32.gmra.mxu0 %v1840
  %v2011 = vpop.f32.mrf.mxu0
  %v2012 = vadd.f32 %v1823, %v2011
  %v2013 = vpop.f32.mrf.mxu0
  %2014 = vmatprep.mubr.f32.mxu0 0.0
  %2015 = vmatmul.mubr.f32.gmra.mxu0 %v1843
  %v2016 = vpop.f32.mrf.mxu0
  %v2017 = vadd.f32 %v1823, %v2016
  %v2018 = vpop.f32.mrf.mxu0
  %2019 = vmatprep.mubr.f32.mxu0 0.0
  %2020 = vmatmul.mubr.f32.gmra.mxu0 %v1846
  %v2021 = vpop.f32.mrf.mxu0
  %v2022 = vadd.f32 %v1823, %v2021
  %v2023 = vpop.f32.mrf.mxu0
  %2024 = vmatprep.mubr.f32.mxu0 0.0
  %2025 = vmatmul.mubr.f32.gmra.mxu0 %v1849
  %v2026 = vpop.f32.mrf.mxu0
  %v2027 = vadd.f32 %v1823, %v2026
  %v2028 = vpop.f32.mrf.mxu0
  %2029 = vmatprep.mubr.f32.mxu0 0.0
  %2030 = vmatmul.mubr.f32.gmra.mxu0 %v1852
  %v2031 = vpop.f32.mrf.mxu0
  %v2032 = vadd.f32 %v1823, %v2031
  %v2033 = vpop.f32.mrf.mxu0
  %2034 = vmatprep.mubr.f32.mxu0 0.0
  %2035 = vmatmul.mubr.f32.gmra.mxu0 %v1855
  %v2036 = vpop.f32.mrf.mxu0
  %v2037 = vadd.f32 %v1823, %v2036
  %v2038 = vpop.f32.mrf.mxu0
  %2039 = vmatprep.mubr.f32.mxu0 0.0
  %2040 = vmatmul.mubr.f32.gmra.mxu0 %v1858
  %v2041 = vpop.f32.mrf.mxu0
  %v2042 = vadd.f32 %v1823, %v2041
  %v2043 = vpop.f32.mrf.mxu0
  %2044 = vmatprep.mubr.f32.mxu0 0.0
  %2045 = vmatmul.mubr.f32.gmra.mxu0 %v1861
  %v2046 = vpop.f32.mrf.mxu0
  %v2047 = vadd.f32 %v1823, %v2046
  %v2048 = vpop.f32.mrf.mxu0
  %2049 = vmatprep.mubr.f32.mxu0 0.0
  %2050 = vmatmul.mubr.f32.gmra.mxu0 %v1864
  %v2051 = vpop.f32.mrf.mxu0
  %v2052 = vadd.f32 %v1823, %v2051
  %v2053 = vpop.f32.mrf.mxu0
  %2054 = vmatprep.mubr.f32.mxu0 0.0
  %2055 = vmatmul.mubr.f32.gmra.mxu0 %v1867
  %v2056 = vpop.f32.mrf.mxu0
  %v2057 = vadd.f32 %v1823, %v2056
  %v2058 = vpop.f32.mrf.mxu0
  %2059 = vmatprep.mubr.f32.mxu0 0.0
  %2060 = vmatmul.mubr.f32.gmra.mxu0 %v1870
  %v2061 = vpop.f32.mrf.mxu0
  %v2062 = vadd.f32 %v1823, %v2061
  %v2063 = vpop.f32.mrf.mxu0
  %2064 = vmatprep.mubr.f32.mxu0 0.0
  %2065 = vmatmul.mubr.f32.gmra.mxu0 %v1873
  %v2066 = vpop.f32.mrf.mxu0
  %v2067 = vadd.f32 %v1823, %v2066
  %v2068 = vpop.f32.mrf.mxu0
  %2069 = vmatprep.mubr.f32.mxu0 0.0
  %2070 = vmatmul.mubr.f32.gmra.mxu0 %v1876
  %v2071 = vpop.f32.mrf.mxu0
  %v2072 = vadd.f32 %v1823, %v2071
  %v2073 = vpop.f32.mrf.mxu0
  %2074 = vmatprep.mubr.f32.mxu0 0.0
  %2075 = vmatmul.mubr.f32.gmra.mxu0 %v1879
  %v2076 = vpop.f32.mrf.mxu0
  %v2077 = vadd.f32 %v1823, %v2076
  %v2078 = vpop.f32.mrf.mxu0
  %2079 = vmatprep.mubr.f32.mxu0 0.0
  %2080 = vmatmul.mubr.f32.gmra.mxu0 %v1882
  %v2081 = vpop.f32.mrf.mxu0
  %v2082 = vadd.f32 %v1823, %v2081
  %v2083 = vpop.f32.mrf.mxu0
  %2084 = vmatprep.mubr.f32.mxu0 0.0
  %2085 = vmatmul.mubr.f32.gmra.mxu0 %v1885
  %v2086 = vpop.f32.mrf.mxu0
  %v2087 = vadd.f32 %v1823, %v2086
  %v2088 = vpop.f32.mrf.mxu0
  %2089 = vmatprep.mubr.f32.mxu0 0.0
  %2090 = vmatmul.mubr.f32.gmra.mxu0 %v1888
  %v2091 = vpop.f32.mrf.mxu0
  %v2092 = vadd.f32 %v1823, %v2091
  %v2093 = vpop.f32.mrf.mxu0
  %2094 = vmatprep.mubr.f32.mxu0 0.0
  %2095 = vmatmul.mubr.f32.gmra.mxu0 %v1891
  %v2096 = vpop.f32.mrf.mxu0
  %v2097 = vadd.f32 %v1823, %v2096
  %v2098 = vpop.f32.mrf.mxu0
  %2099 = vmatprep.mubr.f32.mxu0 0.0
  %2100 = vmatmul.mubr.f32.gmra.mxu0 %v1894
  %v2101 = vpop.f32.mrf.mxu0
  %v2102 = vadd.f32 %v1823, %v2101
  %v2103 = vpop.f32.mrf.mxu0
  %2104 = vmatprep.mubr.f32.mxu0 0.0
  %2105 = vmatmul.mubr.f32.gmra.mxu0 %v1897
  %v2106 = vpop.f32.mrf.mxu0
  %v2107 = vadd.f32 %v1823, %v2106
  %v2108 = vpop.f32.mrf.mxu0
  %2109 = vmatprep.mubr.f32.mxu0 0.0
  %2110 = vmatmul.mubr.f32.gmra.mxu0 %v1900
  %v2111 = vpop.f32.mrf.mxu0
  %v2112 = vadd.f32 %v1823, %v2111
  %v2113 = vpop.f32.mrf.mxu0
  %2114 = vmatprep.mubr.f32.mxu0 0.0
  %2115 = vmatmul.mubr.f32.gmra.mxu0 %v1903
  %v2116 = vpop.f32.mrf.mxu0
  %v2117 = vadd.f32 %v1823, %v2116
  %v2118 = vpop.f32.mrf.mxu0
  %2119 = vmatprep.mubr.f32.mxu0 0.0
  %2120 = vmatmul.mubr.f32.gmra.mxu0 %v1906
  %v2121 = vpop.f32.mrf.mxu0
  %v2122 = vadd.f32 %v1823, %v2121
  %v2123 = vpop.f32.mrf.mxu0
  %2124 = vmatprep.mubr.f32.mxu0 0.0
  %2125 = vmatmul.mubr.f32.gmra.mxu0 %v1909
  %v2126 = vpop.f32.mrf.mxu0
  %v2127 = vadd.f32 %v1823, %v2126
  %v2128 = vpop.f32.mrf.mxu0
  %2129 = vmatprep.mubr.f32.mxu0 0.0
  %2130 = vmatmul.mubr.f32.gmra.mxu0 %v1912
  %v2131 = vpop.f32.mrf.mxu0
  %v2132 = vadd.f32 %v1823, %v2131
  %v2133 = vpop.f32.mrf.mxu0
  %2134 = vmatprep.mubr.f32.mxu0 0.0
  %2135 = vmatmul.mubr.f32.gmra.mxu0 %v1915
  %v2136 = vpop.f32.mrf.mxu0
  %v2137 = vadd.f32 %v1823, %v2136
  %v2138 = vpop.f32.mrf.mxu0
  %2139 = vmatprep.mubr.f32.mxu0 0.0
  %2140 = vmatmul.mubr.f32.gmra.mxu0 %v1918
  %v2141 = vpop.f32.mrf.mxu0
  %v2142 = vadd.f32 %v1823, %v2141
  %v2143 = vpop.f32.mrf.mxu0
  %2144 = vdwg.mxu0
  %v2145 = vsub.f32 %v1430, %v1987
  %v2146 = vsub.f32 %v1431, %v1992
  %v2147 = vsub.f32 %v1432, %v1997
  %v2148 = vsub.f32 %v1433, %v2002
  %v2149 = vsub.f32 %v1434, %v2007
  %v2150 = vsub.f32 %v1435, %v2012
  %v2151 = vsub.f32 %v1436, %v2017
  %v2152 = vsub.f32 %v1437, %v2022
  %v2153 = vsub.f32 %v1438, %v2027
  %v2154 = vsub.f32 %v1439, %v2032
  %v2155 = vsub.f32 %v1440, %v2037
  %v2156 = vsub.f32 %v1441, %v2042
  %v2157 = vsub.f32 %v1442, %v2047
  %v2158 = vsub.f32 %v1443, %v2052
  %v2159 = vsub.f32 %v1444, %v2057
  %v2160 = vsub.f32 %v1445, %v2062
  %v2161 = vsub.f32 %v1446, %v2067
  %v2162 = vsub.f32 %v1447, %v2072
  %v2163 = vsub.f32 %v1448, %v2077
  %v2164 = vsub.f32 %v1449, %v2082
  %v2165 = vsub.f32 %v1450, %v2087
  %v2166 = vsub.f32 %v1451, %v2092
  %v2167 = vsub.f32 %v1452, %v2097
  %v2168 = vsub.f32 %v1453, %v2102
  %v2169 = vsub.f32 %v1454, %v2107
  %v2170 = vsub.f32 %v1455, %v2112
  %v2171 = vsub.f32 %v1456, %v2117
  %v2172 = vsub.f32 %v1457, %v2122
  %v2173 = vsub.f32 %v1458, %v2127
  %v2174 = vsub.f32 %v1459, %v2132
  %v2175 = vsub.f32 %v1460, %v2137
  %v2176 = vsub.f32 %v1461, %v2142
  %v2177 = vsub.f32 0.0, %v1987
  %v2178 = vsub.f32 0.0, %v1992
  %v2179 = vsub.f32 0.0, %v1997
  %v2180 = vsub.f32 0.0, %v2002
  %v2181 = vsub.f32 0.0, %v2007
  %v2182 = vsub.f32 0.0, %v2012
  %v2183 = vsub.f32 0.0, %v2017
  %v2184 = vsub.f32 0.0, %v2022
  %v2185 = vsub.f32 0.0, %v2027
  %v2186 = vsub.f32 0.0, %v2032
  %v2187 = vsub.f32 0.0, %v2037
  %v2188 = vsub.f32 0.0, %v2042
  %v2189 = vsub.f32 0.0, %v2047
  %v2190 = vsub.f32 0.0, %v2052
  %v2191 = vsub.f32 0.0, %v2057
  %v2192 = vsub.f32 0.0, %v2062
  %v2193 = vsub.f32 0.0, %v2067
  %v2194 = vsub.f32 0.0, %v2072
  %v2195 = vsub.f32 0.0, %v2077
  %v2196 = vsub.f32 0.0, %v2082
  %v2197 = vsub.f32 0.0, %v2087
  %v2198 = vsub.f32 0.0, %v2092
  %v2199 = vsub.f32 0.0, %v2097
  %v2200 = vsub.f32 0.0, %v2102
  %v2201 = vsub.f32 0.0, %v2107
  %v2202 = vsub.f32 0.0, %v2112
  %v2203 = vsub.f32 0.0, %v2117
  %v2204 = vsub.f32 0.0, %v2122
  %v2205 = vsub.f32 0.0, %v2127
  %v2206 = vsub.f32 0.0, %v2132
  %v2207 = vsub.f32 0.0, %v2137
  %v2208 = vsub.f32 0.0, %v2142
  %v2209 = vmul.f32 %v2177, 1.442695
  %v2210 = vpow.pop %v2209
  %v2211 = vmul.f32 %v2178, 1.442695
  %v2212 = vpow.pop %v2211
  %v2213 = vmul.f32 %v2179, 1.442695
  %v2214 = vpow.pop %v2213
  %v2215 = vmul.f32 %v2180, 1.442695
  %v2216 = vpow.pop %v2215
  %v2217 = vmul.f32 %v2181, 1.442695
  %v2218 = vpow.pop %v2217
  %v2219 = vmul.f32 %v2182, 1.442695
  %v2220 = vpow.pop %v2219
  %v2221 = vmul.f32 %v2183, 1.442695
  %v2222 = vpow.pop %v2221
  %v2223 = vmul.f32 %v2184, 1.442695
  %v2224 = vpow.pop %v2223
  %v2225 = vmul.f32 %v2185, 1.442695
  %v2226 = vpow.pop %v2225
  %v2227 = vmul.f32 %v2186, 1.442695
  %v2228 = vpow.pop %v2227
  %v2229 = vmul.f32 %v2187, 1.442695
  %v2230 = vpow.pop %v2229
  %v2231 = vmul.f32 %v2188, 1.442695
  %v2232 = vpow.pop %v2231
  %v2233 = vmul.f32 %v2189, 1.442695
  %v2234 = vpow.pop %v2233
  %v2235 = vmul.f32 %v2190, 1.442695
  %v2236 = vpow.pop %v2235
  %v2237 = vmul.f32 %v2191, 1.442695
  %v2238 = vpow.pop %v2237
  %v2239 = vmul.f32 %v2192, 1.442695
  %v2240 = vpow.pop %v2239
  %v2241 = vmul.f32 %v2193, 1.442695
  %v2242 = vpow.pop %v2241
  %v2243 = vmul.f32 %v2194, 1.442695
  %v2244 = vpow.pop %v2243
  %v2245 = vmul.f32 %v2195, 1.442695
  %v2246 = vpow.pop %v2245
  %v2247 = vmul.f32 %v2196, 1.442695
  %v2248 = vpow.pop %v2247
  %v2249 = vmul.f32 %v2197, 1.442695
  %v2250 = vpow.pop %v2249
  %v2251 = vmul.f32 %v2198, 1.442695
  %v2252 = vpow.pop %v2251
  %v2253 = vmul.f32 %v2199, 1.442695
  %v2254 = vpow.pop %v2253
  %v2255 = vmul.f32 %v2200, 1.442695
  %v2256 = vpow.pop %v2255
  %v2257 = vmul.f32 %v2201, 1.442695
  %v2258 = vpow.pop %v2257
  %v2259 = vmul.f32 %v2202, 1.442695
  %v2260 = vpow.pop %v2259
  %v2261 = vmul.f32 %v2203, 1.442695
  %v2262 = vpow.pop %v2261
  %v2263 = vmul.f32 %v2204, 1.442695
  %v2264 = vpow.pop %v2263
  %v2265 = vmul.f32 %v2205, 1.442695
  %v2266 = vpow.pop %v2265
  %v2267 = vmul.f32 %v2206, 1.442695
  %v2268 = vpow.pop %v2267
  %v2269 = vmul.f32 %v2207, 1.442695
  %v2270 = vpow.pop %v2269
  %v2271 = vmul.f32 %v2208, 1.442695
  %v2272 = vpow.pop %v2271
  %2305 = vrot.lane.b32.xlu0 %v2210, 120
  %v2306 = vpop.permute.xlu0 %2305
  %2307 = vrot.lane.b32.xlu0 %v2212, 120
  %v2308 = vpop.permute.xlu0 %2307
  %2309 = vrot.lane.b32.xlu0 %v2214, 120
  %v2310 = vpop.permute.xlu0 %2309
  %2311 = vrot.lane.b32.xlu0 %v2216, 120
  %v2312 = vpop.permute.xlu0 %2311
  %2313 = vrot.lane.b32.xlu0 %v2218, 120
  %v2314 = vpop.permute.xlu0 %2313
  %2315 = vrot.lane.b32.xlu0 %v2220, 120
  %v2316 = vpop.permute.xlu0 %2315
  %2317 = vrot.lane.b32.xlu0 %v2222, 120
  %v2318 = vpop.permute.xlu0 %2317
  %2319 = vrot.lane.b32.xlu0 %v2224, 120
  %v2320 = vpop.permute.xlu0 %2319
  %2321 = vrot.lane.b32.xlu0 %v2226, 120
  %v2322 = vpop.permute.xlu0 %2321
  %2323 = vrot.lane.b32.xlu0 %v2228, 120
  %v2324 = vpop.permute.xlu0 %2323
  %2325 = vrot.lane.b32.xlu0 %v2230, 120
  %v2326 = vpop.permute.xlu0 %2325
  %2327 = vrot.lane.b32.xlu0 %v2232, 120
  %v2328 = vpop.permute.xlu0 %2327
  %2329 = vrot.lane.b32.xlu0 %v2234, 120
  %v2330 = vpop.permute.xlu0 %2329
  %2331 = vrot.lane.b32.xlu0 %v2236, 120
  %v2332 = vpop.permute.xlu0 %2331
  %2333 = vrot.lane.b32.xlu0 %v2238, 120
  %v2334 = vpop.permute.xlu0 %2333
  %2335 = vrot.lane.b32.xlu0 %v2240, 120
  %v2336 = vpop.permute.xlu0 %2335
  %2337 = vrot.lane.b32.xlu0 %v2242, 120
  %v2338 = vpop.permute.xlu0 %2337
  %2339 = vrot.lane.b32.xlu0 %v2244, 120
  %v2340 = vpop.permute.xlu0 %2339
  %2341 = vrot.lane.b32.xlu0 %v2246, 120
  %v2342 = vpop.permute.xlu0 %2341
  %2343 = vrot.lane.b32.xlu0 %v2248, 120
  %v2344 = vpop.permute.xlu0 %2343
  %2345 = vrot.lane.b32.xlu0 %v2250, 120
  %v2346 = vpop.permute.xlu0 %2345
  %2347 = vrot.lane.b32.xlu0 %v2252, 120
  %v2348 = vpop.permute.xlu0 %2347
  %2349 = vrot.lane.b32.xlu0 %v2254, 120
  %v2350 = vpop.permute.xlu0 %2349
  %2351 = vrot.lane.b32.xlu0 %v2256, 120
  %v2352 = vpop.permute.xlu0 %2351
  %2353 = vrot.lane.b32.xlu0 %v2258, 120
  %v2354 = vpop.permute.xlu0 %2353
  %2355 = vrot.lane.b32.xlu0 %v2260, 120
  %v2356 = vpop.permute.xlu0 %2355
  %2357 = vrot.lane.b32.xlu0 %v2262, 120
  %v2358 = vpop.permute.xlu0 %2357
  %2359 = vrot.lane.b32.xlu0 %v2264, 120
  %v2360 = vpop.permute.xlu0 %2359
  %2361 = vrot.lane.b32.xlu0 %v2266, 120
  %v2362 = vpop.permute.xlu0 %2361
  %2363 = vrot.lane.b32.xlu0 %v2268, 120
  %v2364 = vpop.permute.xlu0 %2363
  %2365 = vrot.lane.b32.xlu0 %v2270, 120
  %v2366 = vpop.permute.xlu0 %2365
  %2367 = vrot.lane.b32.xlu0 %v2272, 120
  %v2368 = vpop.permute.xlu0 %2367
  %v2401 = vmul.f32 %v2145, %v2306
  %v2402 = vmul.f32 %v2146, %v2308
  %v2403 = vmul.f32 %v2147, %v2310
  %v2404 = vmul.f32 %v2148, %v2312
  %v2405 = vmul.f32 %v2149, %v2314
  %v2406 = vmul.f32 %v2150, %v2316
  %v2407 = vmul.f32 %v2151, %v2318
  %v2408 = vmul.f32 %v2152, %v2320
  %v2409 = vmul.f32 %v2153, %v2322
  %v2410 = vmul.f32 %v2154, %v2324
  %v2411 = vmul.f32 %v2155, %v2326
  %v2412 = vmul.f32 %v2156, %v2328
  %v2413 = vmul.f32 %v2157, %v2330
  %v2414 = vmul.f32 %v2158, %v2332
  %v2415 = vmul.f32 %v2159, %v2334
  %v2416 = vmul.f32 %v2160, %v2336
  %v2417 = vmul.f32 %v2161, %v2338
  %v2418 = vmul.f32 %v2162, %v2340
  %v2419 = vmul.f32 %v2163, %v2342
  %v2420 = vmul.f32 %v2164, %v2344
  %v2421 = vmul.f32 %v2165, %v2346
  %v2422 = vmul.f32 %v2166, %v2348
  %v2423 = vmul.f32 %v2167, %v2350
  %v2424 = vmul.f32 %v2168, %v2352
  %v2425 = vmul.f32 %v2169, %v2354
  %v2426 = vmul.f32 %v2170, %v2356
  %v2427 = vmul.f32 %v2171, %v2358
  %v2428 = vmul.f32 %v2172, %v2360
  %v2429 = vmul.f32 %v2173, %v2362
  %v2430 = vmul.f32 %v2174, %v2364
  %v2431 = vmul.f32 %v2175, %v2366
  %v2432 = vmul.f32 %v2176, %v2368
  %v2433 = vmul.f32 %v2401, %v2401
  %v2434 = vmul.f32 %v2402, %v2402
  %v2435 = vmul.f32 %v2403, %v2403
  %v2436 = vmul.f32 %v2404, %v2404
  %v2437 = vmul.f32 %v2405, %v2405
  %v2438 = vmul.f32 %v2406, %v2406
  %v2439 = vmul.f32 %v2407, %v2407
  %v2440 = vmul.f32 %v2408, %v2408
  %v2441 = vmul.f32 %v2409, %v2409
  %v2442 = vmul.f32 %v2410, %v2410
  %v2443 = vmul.f32 %v2411, %v2411
  %v2444 = vmul.f32 %v2412, %v2412
  %v2445 = vmul.f32 %v2413, %v2413
  %v2446 = vmul.f32 %v2414, %v2414
  %v2447 = vmul.f32 %v2415, %v2415
  %v2448 = vmul.f32 %v2416, %v2416
  %v2449 = vmul.f32 %v2417, %v2417
  %v2450 = vmul.f32 %v2418, %v2418
  %v2451 = vmul.f32 %v2419, %v2419
  %v2452 = vmul.f32 %v2420, %v2420
  %v2453 = vmul.f32 %v2421, %v2421
  %v2454 = vmul.f32 %v2422, %v2422
  %v2455 = vmul.f32 %v2423, %v2423
  %v2456 = vmul.f32 %v2424, %v2424
  %v2457 = vmul.f32 %v2425, %v2425
  %v2458 = vmul.f32 %v2426, %v2426
  %v2459 = vmul.f32 %v2427, %v2427
  %v2460 = vmul.f32 %v2428, %v2428
  %v2461 = vmul.f32 %v2429, %v2429
  %v2462 = vmul.f32 %v2430, %v2430
  %v2463 = vmul.f32 %v2431, %v2431
  %v2464 = vmul.f32 %v2432, %v2432
  %v2465 = vsel %vm1466, %v2433, 0.0
  %2466 = vadd.xlane.f32.xlu0 %v2465
  %v2467 = vpop.xlane.xlu0 %2466
  %v2468 = vsel %vm1466, %v2434, 0.0
  %2469 = vadd.xlane.f32.xlu0 %v2468
  %v2470 = vpop.xlane.xlu0 %2469
  %v2471 = vsel %vm1466, %v2435, 0.0
  %2472 = vadd.xlane.f32.xlu0 %v2471
  %v2473 = vpop.xlane.xlu0 %2472
  %v2474 = vsel %vm1466, %v2436, 0.0
  %2475 = vadd.xlane.f32.xlu0 %v2474
  %v2476 = vpop.xlane.xlu0 %2475
  %v2477 = vsel %vm1466, %v2437, 0.0
  %2478 = vadd.xlane.f32.xlu0 %v2477
  %v2479 = vpop.xlane.xlu0 %2478
  %v2480 = vsel %vm1466, %v2438, 0.0
  %2481 = vadd.xlane.f32.xlu0 %v2480
  %v2482 = vpop.xlane.xlu0 %2481
  %v2483 = vsel %vm1466, %v2439, 0.0
  %2484 = vadd.xlane.f32.xlu0 %v2483
  %v2485 = vpop.xlane.xlu0 %2484
  %v2486 = vsel %vm1466, %v2440, 0.0
  %2487 = vadd.xlane.f32.xlu0 %v2486
  %v2488 = vpop.xlane.xlu0 %2487
  %v2489 = vsel %vm1466, %v2441, 0.0
  %2490 = vadd.xlane.f32.xlu0 %v2489
  %v2491 = vpop.xlane.xlu0 %2490
  %v2492 = vsel %vm1466, %v2442, 0.0
  %2493 = vadd.xlane.f32.xlu0 %v2492
  %v2494 = vpop.xlane.xlu0 %2493
  %v2495 = vsel %vm1466, %v2443, 0.0
  %2496 = vadd.xlane.f32.xlu0 %v2495
  %v2497 = vpop.xlane.xlu0 %2496
  %v2498 = vsel %vm1466, %v2444, 0.0
  %2499 = vadd.xlane.f32.xlu0 %v2498
  %v2500 = vpop.xlane.xlu0 %2499
  %v2501 = vsel %vm1466, %v2445, 0.0
  %2502 = vadd.xlane.f32.xlu0 %v2501
  %v2503 = vpop.xlane.xlu0 %2502
  %v2504 = vsel %vm1466, %v2446, 0.0
  %2505 = vadd.xlane.f32.xlu0 %v2504
  %v2506 = vpop.xlane.xlu0 %2505
  %v2507 = vsel %vm1466, %v2447, 0.0
  %2508 = vadd.xlane.f32.xlu0 %v2507
  %v2509 = vpop.xlane.xlu0 %2508
  %v2510 = vsel %vm1466, %v2448, 0.0
  %2511 = vadd.xlane.f32.xlu0 %v2510
  %v2512 = vpop.xlane.xlu0 %2511
  %v2513 = vsel %vm1466, %v2449, 0.0
  %2514 = vadd.xlane.f32.xlu0 %v2513
  %v2515 = vpop.xlane.xlu0 %2514
  %v2516 = vsel %vm1466, %v2450, 0.0
  %2517 = vadd.xlane.f32.xlu0 %v2516
  %v2518 = vpop.xlane.xlu0 %2517
  %v2519 = vsel %vm1466, %v2451, 0.0
  %2520 = vadd.xlane.f32.xlu0 %v2519
  %v2521 = vpop.xlane.xlu0 %2520
  %v2522 = vsel %vm1466, %v2452, 0.0
  %2523 = vadd.xlane.f32.xlu0 %v2522
  %v2524 = vpop.xlane.xlu0 %2523
  %v2525 = vsel %vm1466, %v2453, 0.0
  %2526 = vadd.xlane.f32.xlu0 %v2525
  %v2527 = vpop.xlane.xlu0 %2526
  %v2528 = vsel %vm1466, %v2454, 0.0
  %2529 = vadd.xlane.f32.xlu0 %v2528
  %v2530 = vpop.xlane.xlu0 %2529
  %v2531 = vsel %vm1466, %v2455, 0.0
  %2532 = vadd.xlane.f32.xlu0 %v2531
  %v2533 = vpop.xlane.xlu0 %2532
  %v2534 = vsel %vm1466, %v2456, 0.0
  %2535 = vadd.xlane.f32.xlu0 %v2534
  %v2536 = vpop.xlane.xlu0 %2535
  %v2537 = vsel %vm1466, %v2457, 0.0
  %2538 = vadd.xlane.f32.xlu0 %v2537
  %v2539 = vpop.xlane.xlu0 %2538
  %v2540 = vsel %vm1466, %v2458, 0.0
  %2541 = vadd.xlane.f32.xlu0 %v2540
  %v2542 = vpop.xlane.xlu0 %2541
  %v2543 = vsel %vm1466, %v2459, 0.0
  %2544 = vadd.xlane.f32.xlu0 %v2543
  %v2545 = vpop.xlane.xlu0 %2544
  %v2546 = vsel %vm1466, %v2460, 0.0
  %2547 = vadd.xlane.f32.xlu0 %v2546
  %v2548 = vpop.xlane.xlu0 %2547
  %v2549 = vsel %vm1466, %v2461, 0.0
  %2550 = vadd.xlane.f32.xlu0 %v2549
  %v2551 = vpop.xlane.xlu0 %2550
  %v2552 = vsel %vm1466, %v2462, 0.0
  %2553 = vadd.xlane.f32.xlu0 %v2552
  %v2554 = vpop.xlane.xlu0 %2553
  %v2555 = vsel %vm1466, %v2463, 0.0
  %2556 = vadd.xlane.f32.xlu0 %v2555
  %v2557 = vpop.xlane.xlu0 %2556
  %v2558 = vsel %vm1466, %v2464, 0.0
  %2559 = vadd.xlane.f32.xlu0 %v2558
  %v2560 = vpop.xlane.xlu0 %2559
  %v2561 = vmul.f32 %v2467, -0.5
  %v2562 = vmul.f32 %v2470, -0.5
  %v2563 = vmul.f32 %v2473, -0.5
  %v2564 = vmul.f32 %v2476, -0.5
  %v2565 = vmul.f32 %v2479, -0.5
  %v2566 = vmul.f32 %v2482, -0.5
  %v2567 = vmul.f32 %v2485, -0.5
  %v2568 = vmul.f32 %v2488, -0.5
  %v2569 = vmul.f32 %v2491, -0.5
  %v2570 = vmul.f32 %v2494, -0.5
  %v2571 = vmul.f32 %v2497, -0.5
  %v2572 = vmul.f32 %v2500, -0.5
  %v2573 = vmul.f32 %v2503, -0.5
  %v2574 = vmul.f32 %v2506, -0.5
  %v2575 = vmul.f32 %v2509, -0.5
  %v2576 = vmul.f32 %v2512, -0.5
  %v2577 = vmul.f32 %v2515, -0.5
  %v2578 = vmul.f32 %v2518, -0.5
  %v2579 = vmul.f32 %v2521, -0.5
  %v2580 = vmul.f32 %v2524, -0.5
  %v2581 = vmul.f32 %v2527, -0.5
  %v2582 = vmul.f32 %v2530, -0.5
  %v2583 = vmul.f32 %v2533, -0.5
  %v2584 = vmul.f32 %v2536, -0.5
  %v2585 = vmul.f32 %v2539, -0.5
  %v2586 = vmul.f32 %v2542, -0.5
  %v2587 = vmul.f32 %v2545, -0.5
  %v2588 = vmul.f32 %v2548, -0.5
  %v2589 = vmul.f32 %v2551, -0.5
  %v2590 = vmul.f32 %v2554, -0.5
  %v2591 = vmul.f32 %v2557, -0.5
  %v2592 = vmul.f32 %v2560, -0.5
  %v2593 = vsub.f32 %v2561, 7.351508
  %v2594 = vsub.f32 %v2562, 7.351508
  %v2595 = vsub.f32 %v2563, 7.351508
  %v2596 = vsub.f32 %v2564, 7.351508
  %v2597 = vsub.f32 %v2565, 7.351508
  %v2598 = vsub.f32 %v2566, 7.351508
  %v2599 = vsub.f32 %v2567, 7.351508
  %v2600 = vsub.f32 %v2568, 7.351508
  %v2601 = vsub.f32 %v2569, 7.351508
  %v2602 = vsub.f32 %v2570, 7.351508
  %v2603 = vsub.f32 %v2571, 7.351508
  %v2604 = vsub.f32 %v2572, 7.351508
  %v2605 = vsub.f32 %v2573, 7.351508
  %v2606 = vsub.f32 %v2574, 7.351508
  %v2607 = vsub.f32 %v2575, 7.351508
  %v2608 = vsub.f32 %v2576, 7.351508
  %v2609 = vsub.f32 %v2577, 7.351508
  %v2610 = vsub.f32 %v2578, 7.351508
  %v2611 = vsub.f32 %v2579, 7.351508
  %v2612 = vsub.f32 %v2580, 7.351508
  %v2613 = vsub.f32 %v2581, 7.351508
  %v2614 = vsub.f32 %v2582, 7.351508
  %v2615 = vsub.f32 %v2583, 7.351508
  %v2616 = vsub.f32 %v2584, 7.351508
  %v2617 = vsub.f32 %v2585, 7.351508
  %v2618 = vsub.f32 %v2586, 7.351508
  %v2619 = vsub.f32 %v2587, 7.351508
  %v2620 = vsub.f32 %v2588, 7.351508
  %v2621 = vsub.f32 %v2589, 7.351508
  %v2622 = vsub.f32 %v2590, 7.351508
  %v2623 = vsub.f32 %v2591, 7.351508
  %v2624 = vsub.f32 %v2592, 7.351508
  %v2625 = vadd.f32 %v2593, %v1016
  %v2626 = vadd.f32 %v2594, %v1021
  %v2627 = vadd.f32 %v2595, %v1026
  %v2628 = vadd.f32 %v2596, %v1031
  %v2629 = vadd.f32 %v2597, %v1036
  %v2630 = vadd.f32 %v2598, %v1041
  %v2631 = vadd.f32 %v2599, %v1046
  %v2632 = vadd.f32 %v2600, %v1051
  %v2633 = vadd.f32 %v2601, %v1056
  %v2634 = vadd.f32 %v2602, %v1061
  %v2635 = vadd.f32 %v2603, %v1066
  %v2636 = vadd.f32 %v2604, %v1071
  %v2637 = vadd.f32 %v2605, %v1076
  %v2638 = vadd.f32 %v2606, %v1081
  %v2639 = vadd.f32 %v2607, %v1086
  %v2640 = vadd.f32 %v2608, %v1091
  %v2641 = vadd.f32 %v2609, %v1096
  %v2642 = vadd.f32 %v2610, %v1101
  %v2643 = vadd.f32 %v2611, %v1106
  %v2644 = vadd.f32 %v2612, %v1111
  %v2645 = vadd.f32 %v2613, %v1116
  %v2646 = vadd.f32 %v2614, %v1121
  %v2647 = vadd.f32 %v2615, %v1126
  %v2648 = vadd.f32 %v2616, %v1131
  %v2649 = vadd.f32 %v2617, %v1136
  %v2650 = vadd.f32 %v2618, %v1141
  %v2651 = vadd.f32 %v2619, %v1146
  %v2652 = vadd.f32 %v2620, %v1151
  %v2653 = vadd.f32 %v2621, %v1156
  %v2654 = vadd.f32 %v2622, %v1161
  %v2655 = vadd.f32 %v2623, %v1166
  %v2656 = vadd.f32 %v2624, %v1171
  %v2657 = vadd.f32 %v2625, %v1987
  %v2658 = vadd.f32 %v2626, %v1992
  %v2659 = vadd.f32 %v2627, %v1997
  %v2660 = vadd.f32 %v2628, %v2002
  %v2661 = vadd.f32 %v2629, %v2007
  %v2662 = vadd.f32 %v2630, %v2012
  %v2663 = vadd.f32 %v2631, %v2017
  %v2664 = vadd.f32 %v2632, %v2022
  %v2665 = vadd.f32 %v2633, %v2027
  %v2666 = vadd.f32 %v2634, %v2032
  %v2667 = vadd.f32 %v2635, %v2037
  %v2668 = vadd.f32 %v2636, %v2042
  %v2669 = vadd.f32 %v2637, %v2047
  %v2670 = vadd.f32 %v2638, %v2052
  %v2671 = vadd.f32 %v2639, %v2057
  %v2672 = vadd.f32 %v2640, %v2062
  %v2673 = vadd.f32 %v2641, %v2067
  %v2674 = vadd.f32 %v2642, %v2072
  %v2675 = vadd.f32 %v2643, %v2077
  %v2676 = vadd.f32 %v2644, %v2082
  %v2677 = vadd.f32 %v2645, %v2087
  %v2678 = vadd.f32 %v2646, %v2092
  %v2679 = vadd.f32 %v2647, %v2097
  %v2680 = vadd.f32 %v2648, %v2102
  %v2681 = vadd.f32 %v2649, %v2107
  %v2682 = vadd.f32 %v2650, %v2112
  %v2683 = vadd.f32 %v2651, %v2117
  %v2684 = vadd.f32 %v2652, %v2122
  %v2685 = vadd.f32 %v2653, %v2127
  %v2686 = vadd.f32 %v2654, %v2132
  %v2687 = vadd.f32 %v2655, %v2137
  %v2688 = vadd.f32 %v2656, %v2142
  %2721 = vrot.lane.b32.xlu0 %v2657, 112
  %v2722 = vpop.permute.xlu0 %2721
  %2723 = vrot.lane.b32.xlu0 %v2658, 112
  %v2724 = vpop.permute.xlu0 %2723
  %2725 = vrot.lane.b32.xlu0 %v2659, 112
  %v2726 = vpop.permute.xlu0 %2725
  %2727 = vrot.lane.b32.xlu0 %v2660, 112
  %v2728 = vpop.permute.xlu0 %2727
  %2729 = vrot.lane.b32.xlu0 %v2661, 112
  %v2730 = vpop.permute.xlu0 %2729
  %2731 = vrot.lane.b32.xlu0 %v2662, 112
  %v2732 = vpop.permute.xlu0 %2731
  %2733 = vrot.lane.b32.xlu0 %v2663, 112
  %v2734 = vpop.permute.xlu0 %2733
  %2735 = vrot.lane.b32.xlu0 %v2664, 112
  %v2736 = vpop.permute.xlu0 %2735
  %2737 = vrot.lane.b32.xlu0 %v2665, 112
  %v2738 = vpop.permute.xlu0 %2737
  %2739 = vrot.lane.b32.xlu0 %v2666, 112
  %v2740 = vpop.permute.xlu0 %2739
  %2741 = vrot.lane.b32.xlu0 %v2667, 112
  %v2742 = vpop.permute.xlu0 %2741
  %2743 = vrot.lane.b32.xlu0 %v2668, 112
  %v2744 = vpop.permute.xlu0 %2743
  %2745 = vrot.lane.b32.xlu0 %v2669, 112
  %v2746 = vpop.permute.xlu0 %2745
  %2747 = vrot.lane.b32.xlu0 %v2670, 112
  %v2748 = vpop.permute.xlu0 %2747
  %2749 = vrot.lane.b32.xlu0 %v2671, 112
  %v2750 = vpop.permute.xlu0 %2749
  %2751 = vrot.lane.b32.xlu0 %v2672, 112
  %v2752 = vpop.permute.xlu0 %2751
  %2753 = vrot.lane.b32.xlu0 %v2673, 112
  %v2754 = vpop.permute.xlu0 %2753
  %2755 = vrot.lane.b32.xlu0 %v2674, 112
  %v2756 = vpop.permute.xlu0 %2755
  %2757 = vrot.lane.b32.xlu0 %v2675, 112
  %v2758 = vpop.permute.xlu0 %2757
  %2759 = vrot.lane.b32.xlu0 %v2676, 112
  %v2760 = vpop.permute.xlu0 %2759
  %2761 = vrot.lane.b32.xlu0 %v2677, 112
  %v2762 = vpop.permute.xlu0 %2761
  %2763 = vrot.lane.b32.xlu0 %v2678, 112
  %v2764 = vpop.permute.xlu0 %2763
  %2765 = vrot.lane.b32.xlu0 %v2679, 112
  %v2766 = vpop.permute.xlu0 %2765
  %2767 = vrot.lane.b32.xlu0 %v2680, 112
  %v2768 = vpop.permute.xlu0 %2767
  %2769 = vrot.lane.b32.xlu0 %v2681, 112
  %v2770 = vpop.permute.xlu0 %2769
  %2771 = vrot.lane.b32.xlu0 %v2682, 112
  %v2772 = vpop.permute.xlu0 %2771
  %2773 = vrot.lane.b32.xlu0 %v2683, 112
  %v2774 = vpop.permute.xlu0 %2773
  %2775 = vrot.lane.b32.xlu0 %v2684, 112
  %v2776 = vpop.permute.xlu0 %2775
  %2777 = vrot.lane.b32.xlu0 %v2685, 112
  %v2778 = vpop.permute.xlu0 %2777
  %2779 = vrot.lane.b32.xlu0 %v2686, 112
  %v2780 = vpop.permute.xlu0 %2779
  %2781 = vrot.lane.b32.xlu0 %v2687, 112
  %v2782 = vpop.permute.xlu0 %2781
  %2783 = vrot.lane.b32.xlu0 %v2688, 112
  %v2784 = vpop.permute.xlu0 %2783
  %vm2817 = vcmask 7168
  %2818 = vst.msk [vmem:[%s2] sm:$0xff] %vm2817, %v2722
  %2819 = vst.msk [vmem:[%s2 + $0x8] sm:$0xff] %vm2817, %v2724
  %2820 = vst.msk [vmem:[%s2 + $0x10] sm:$0xff] %vm2817, %v2726
  %2821 = vst.msk [vmem:[%s2 + $0x18] sm:$0xff] %vm2817, %v2728
  %2822 = vst.msk [vmem:[%s2 + $0x20] sm:$0xff] %vm2817, %v2730
  %2823 = vst.msk [vmem:[%s2 + $0x28] sm:$0xff] %vm2817, %v2732
  %2824 = vst.msk [vmem:[%s2 + $0x30] sm:$0xff] %vm2817, %v2734
  %2825 = vst.msk [vmem:[%s2 + $0x38] sm:$0xff] %vm2817, %v2736
  %2826 = vst.msk [vmem:[%s2 + $0x40] sm:$0xff] %vm2817, %v2738
  %2827 = vst.msk [vmem:[%s2 + $0x48] sm:$0xff] %vm2817, %v2740
  %2828 = vst.msk [vmem:[%s2 + $0x50] sm:$0xff] %vm2817, %v2742
  %2829 = vst.msk [vmem:[%s2 + $0x58] sm:$0xff] %vm2817, %v2744
  %2830 = vst.msk [vmem:[%s2 + $0x60] sm:$0xff] %vm2817, %v2746
  %2831 = vst.msk [vmem:[%s2 + $0x68] sm:$0xff] %vm2817, %v2748
  %2832 = vst.msk [vmem:[%s2 + $0x70] sm:$0xff] %vm2817, %v2750
  %2833 = vst.msk [vmem:[%s2 + $0x78] sm:$0xff] %vm2817, %v2752
  %2834 = vst.msk [vmem:[%s2 + $0x80] sm:$0xff] %vm2817, %v2754
  %2835 = vst.msk [vmem:[%s2 + $0x88] sm:$0xff] %vm2817, %v2756
  %2836 = vst.msk [vmem:[%s2 + $0x90] sm:$0xff] %vm2817, %v2758
  %2837 = vst.msk [vmem:[%s2 + $0x98] sm:$0xff] %vm2817, %v2760
  %2838 = vst.msk [vmem:[%s2 + $0xa0] sm:$0xff] %vm2817, %v2762
  %2839 = vst.msk [vmem:[%s2 + $0xa8] sm:$0xff] %vm2817, %v2764
  %2840 = vst.msk [vmem:[%s2 + $0xb0] sm:$0xff] %vm2817, %v2766
  %2841 = vst.msk [vmem:[%s2 + $0xb8] sm:$0xff] %vm2817, %v2768
  %2842 = vst.msk [vmem:[%s2 + $0xc0] sm:$0xff] %vm2817, %v2770
  %2843 = vst.msk [vmem:[%s2 + $0xc8] sm:$0xff] %vm2817, %v2772
  %2844 = vst.msk [vmem:[%s2 + $0xd0] sm:$0xff] %vm2817, %v2774
  %2845 = vst.msk [vmem:[%s2 + $0xd8] sm:$0xff] %vm2817, %v2776
  %2846 = vst.msk [vmem:[%s2 + $0xe0] sm:$0xff] %vm2817, %v2778
  %2847 = vst.msk [vmem:[%s2 + $0xe8] sm:$0xff] %vm2817, %v2780
  %2848 = vst.msk [vmem:[%s2 + $0xf0] sm:$0xff] %vm2817, %v2782
  %2849 = vst.msk [vmem:[%s2 + $0xf8] sm:$0xff] %vm2817, %v2784
  // Predicated region
  $region10: #{outlier_log_prob.1} parent=0 // pred_check
    _
  $region11: #{outlier_log_prob.1} parent=0 // pred_check_branch
    %2851 = sbr.rel (0) target = $region13
  $region12: #{outlier_log_prob.1} parent=0 // pred_region
    _
  $region13: #{outlier_log_prob.1} parent=0 // pred_fallthru
    _
  // Predicated region
  $region14: #{outlier_log_prob.1} parent=0 // pred_check
    _
  $region15: #{outlier_log_prob.1} parent=0 // pred_check_branch
    %2853 = sbr.rel (0) target = $region17
  $region16: #{outlier_log_prob.1} parent=0 // pred_region
    _
  $region17: #{outlier_log_prob.1} parent=0 // pred_fallthru
    _

</llo_original>
